<compile_context>
chip_gen: v7x
topology: tpu7x:2x2x1
jax: 0.10.0
libtpu: 0.0.40
codegen_flags: <defaults>
</compile_context>

<pallas_src>
import jax
import jax.numpy as jnp
from jax.experimental import pallas as pl
from jax.experimental.pallas import tpu as pltpu


def _erf(z):
    # Abramowitz & Stegun 7.1.26 rational approximation (|err| < 1.5e-7).
    # exp and the approx reciprocal go to the EUP slot; the rest is VPU.
    a1, a2, a3, a4, a5 = 0.254829592, -0.284496736, 1.421413741, -1.453152027, 1.061405429
    p = 0.3275911
    sgn = jnp.where(z >= 0, 1.0, -1.0)
    za = jnp.abs(z)
    t = pl.reciprocal(1.0 + p * za, approx=True)
    poly = ((((a5 * t + a4) * t + a3) * t + a2) * t + a1) * t
    return sgn * (1.0 - poly * jnp.exp(-za * za))


def _gelu(x):
    # erf-based GELU, matching torch.nn.GELU() default.
    return 0.5 * x * (1.0 + _erf(x * 0.7071067811865476))


def mlp_kernel(x_ref, ln_w_ref, ln_b_ref, w1_ref, b1_ref, kd_ref, bd_ref,
               w2_ref, b2_ref, o_ref, pad_ref):
    H, W, C = x_ref.shape[1], x_ref.shape[2], x_ref.shape[3]
    TH = o_ref.shape[1]
    C4 = w1_ref.shape[1]

    j = pl.program_id(1)
    row0 = pl.multiple_of(j * TH, TH)
    has_top = j > 0
    has_bot = j < pl.num_programs(1) - 1

    # Gather the TH-row tile plus a 1-row halo on each side (clamped at the
    # image edges; clamped duplicates are masked to zero after GELU(fc1(.)),
    # which reproduces the depthwise conv's zero padding along H).
    top = jnp.maximum(row0 - 1, 0)
    bot = jnp.minimum(row0 + TH, H - 1)
    x_top = x_ref[0, pl.ds(top, 1)]           # (1,  W, C)
    x_mid = x_ref[0, pl.ds(row0, TH)]         # (TH, W, C)
    x_bot = x_ref[0, pl.ds(bot, 1)]           # (1,  W, C)
    xs = jnp.concatenate([x_top, x_mid, x_bot], axis=0)   # (TH+2, W, C)

    # --- LayerNorm (channels_first: normalize over C, biased var, eps=1e-6) ---
    u = jnp.mean(xs, axis=-1, keepdims=True)
    xc = xs - u
    s = jnp.mean(xc * xc, axis=-1, keepdims=True)
    xn = xc * jax.lax.rsqrt(s + 1e-6)
    xn = xn * ln_w_ref[0] + ln_b_ref[0]

    # --- fc1 (1x1 conv == matmul over channels), bf16 MXU operands + GELU ---
    M = (TH + 2) * W
    h = jnp.dot(xn.reshape(M, C).astype(jnp.bfloat16), w1_ref[...],
                preferred_element_type=jnp.float32) + b1_ref[0]
    h = _gelu(h).reshape(TH + 2, W, C4)

    # Zero halo rows that fall outside the image (conv zero-padding along H).
    ridx = jax.lax.broadcasted_iota(jnp.int32, (TH + 2, W, C4), 0)
    keep = jnp.logical_and(jnp.logical_or(ridx != 0, has_top),
                           jnp.logical_or(ridx != TH + 1, has_bot))
    h_halo = jnp.where(keep, h, 0.0)

    # --- merged depthwise 3x3 conv (pos + sobel_x + sobel_y + laplacian) ---
    # Only the two 1-pixel border columns need zeroing each step; the interior
    # and the halo rows (which already encode the H padding) are fully rewritten.
    pad_ref[:, 0:1, :] = jnp.zeros((TH + 2, 1, C4), jnp.float32)
    pad_ref[:, W + 1:W + 2, :] = jnp.zeros((TH + 2, 1, C4), jnp.float32)
    pad_ref[:, 1:W + 1, :] = h_halo
    kd = kd_ref[...]                                        # (3, 3, C4)
    rows = []
    for dh in range(3):                                     # 3 independent accumulators
        rows.append(pad_ref[dh:dh + TH, 0:W, :] * kd[dh, 0]
                    + pad_ref[dh:dh + TH, 1:W + 1, :] * kd[dh, 1]
                    + pad_ref[dh:dh + TH, 2:W + 2, :] * kd[dh, 2])
    out = bd_ref[0] + (rows[0] + rows[1]) + rows[2]

    # --- residual + GELU, then fc2 (1x1 conv), bf16 MXU operands ---
    y = h[1:TH + 1] + _gelu(out)
    o = jnp.dot(y.reshape(TH * W, C4).astype(jnp.bfloat16), w2_ref[...],
                preferred_element_type=jnp.float32) + b2_ref[0]
    o_ref[0] = o.reshape(TH, W, C)


def mlp_forward(x_nchw, params, tile_h=8):
    N, C, H, W = x_nchw.shape
    C4 = params['w1'].shape[1]
    TH = tile_h if (H % tile_h == 0) else H        # H-tile (multiple of 8 when possible)

    # TODO(synk): keep activations NHWC across layers to drop these HBM transposes.
    x = jnp.transpose(x_nchw, (0, 2, 3, 1)).astype(jnp.float32)    # NHWC

    # bf16 operands for the MXU (accumulation stays f32 in-kernel).
    w1 = params['w1'].astype(jnp.bfloat16)
    w2 = params['w2'].astype(jnp.bfloat16)

    def bc(shape):
        nd = len(shape)
        return pl.BlockSpec(shape, lambda n, j, _nd=nd: (0,) * _nd)

    grid_spec = pltpu.PrefetchScalarGridSpec(
        num_scalar_prefetch=0,
        grid=(N, H // TH),
        in_specs=[
            # x (C-wide) stays VMEM-resident across the H-tiles of one image
            # (block index ignores j -> re-DMA'd only when n changes); the 4x
            # wider C4 intermediates are what get tiled to TH rows.
            pl.BlockSpec((1, H, W, C), lambda n, j: (n, 0, 0, 0)),
            bc((1, C)), bc((1, C)),             # ln_w, ln_b
            bc((C, C4)), bc((1, C4)),           # w1 (bf16), b1
            bc((3, 3, C4)), bc((1, C4)),        # merged depthwise kernel / bias
            bc((C4, C)), bc((1, C)),            # w2 (bf16), b2
        ],
        out_specs=pl.BlockSpec((1, TH, W, C), lambda n, j: (n, j, 0, 0)),
        scratch_shapes=[pltpu.VMEM((TH + 2, W + 2, C4), jnp.float32)],
    )
    out = pl.pallas_call(
        mlp_kernel,
        out_shape=jax.ShapeDtypeStruct((N, H, W, C), jnp.float32),
        grid_spec=grid_spec,
        compiler_params=pltpu.CompilerParams(
            dimension_semantics=("parallel", "parallel"),
            vmem_limit_bytes=32 * 1024 * 1024),
    )(x, params['ln_w'], params['ln_b'], w1, params['b1'],
      params['kd'], params['bd'], w2, params['b2'])
    return jnp.transpose(out, (0, 3, 1, 2))                         # back to NCHW


def init_params(key, dim, mlp_ratio=4):
    C, C4 = dim, dim * mlp_ratio
    ks = jax.random.split(key, 12)
    ln_w = jnp.ones((1, C), jnp.float32)
    ln_b = jnp.zeros((1, C), jnp.float32)
    fc1_w = jax.random.normal(ks[0], (C4, C), jnp.float32) * 0.1     # Conv2d(C,C4,1)
    fc1_b = jax.random.normal(ks[1], (C4,), jnp.float32) * 0.1
    pos_w = jax.random.normal(ks[2], (C4, 3, 3), jnp.float32) * 0.1  # depthwise 3x3
    pos_b = jax.random.normal(ks[3], (C4,), jnp.float32) * 0.1
    fc2_w = jax.random.normal(ks[4], (C, C4), jnp.float32) * 0.1     # Conv2d(C4,C,1)
    fc2_b = jax.random.normal(ks[5], (C,), jnp.float32) * 0.1
    scale_x = jax.random.normal(ks[6], (C4,), jnp.float32) * 0.001
    bias_x = jax.random.normal(ks[7], (C4,), jnp.float32) * 0.001
    scale_y = jax.random.normal(ks[8], (C4,), jnp.float32) * 0.001
    bias_y = jax.random.normal(ks[9], (C4,), jnp.float32) * 0.001
    scale_l = jax.random.normal(ks[10], (C4,), jnp.float32) * 0.001
    bias_l = jax.random.normal(ks[11], (C4,), jnp.float32) * 0.001

    # Fixed masks from MLP.__init__
    mask_x = jnp.array([[0., 1., -1.], [2., 0., -2.], [1., 0., -1.]], jnp.float32)
    mask_y = jnp.array([[1., 2., 1.], [0., 0., 0.], [-1., -2., -1.]], jnp.float32)
    mask_l = jnp.array([[1., 0., 0.], [1., -4., 1.], [0., 1., 0.]], jnp.float32)

    # Merge the four depthwise convs (== MLP.merge_mlp), kernel stored as (3,3,C4).
    kd = (pos_w
          + scale_x[:, None, None] * mask_x[None]
          + scale_y[:, None, None] * mask_y[None]
          + scale_l[:, None, None] * mask_l[None])
    kd = jnp.transpose(kd, (1, 2, 0))
    bd = pos_b + bias_x + bias_y + bias_l

    return dict(
        ln_w=ln_w, ln_b=ln_b,
        w1=jnp.transpose(fc1_w), b1=fc1_b[None, :],
        kd=kd, bd=bd[None, :],
        w2=jnp.transpose(fc2_w), b2=fc2_b[None, :],
    )


def mlp_reference(x_nchw, params):
    # Pure-JAX f32 reference (exact erf GELU, f32 matmuls) for a sanity check.
    x = jnp.transpose(x_nchw, (0, 2, 3, 1)).astype(jnp.float32)
    N, H, W, C = x.shape
    u = jnp.mean(x, axis=-1, keepdims=True)
    xc = x - u
    s = jnp.mean(xc * xc, axis=-1, keepdims=True)
    xn = xc / jnp.sqrt(s + 1e-6) * params['ln_w'][0] + params['ln_b'][0]
    h = jnp.einsum('nhwc,cd->nhwd', xn, params['w1']) + params['b1'][0]
    h = jax.nn.gelu(h, approximate=False)
    xp = jnp.pad(h, ((0, 0), (1, 1), (1, 1), (0, 0)))
    out = jnp.zeros_like(h) + params['bd'][0]
    for dh in range(3):
        for dw in range(3):
            out = out + xp[:, dh:dh + H, dw:dw + W, :] * params['kd'][dh, dw]
    y = h + jax.nn.gelu(out, approximate=False)
    o = jnp.einsum('nhwd,dc->nhwc', y, params['w2']) + params['b2'][0]
    return jnp.transpose(o, (0, 3, 1, 2))


if __name__ == "__main__":
    key = jax.random.PRNGKey(0)
    k_x, k_p = jax.random.split(key)
    N, dim, H, W = 2, 4, 16, 16
    x = jax.random.normal(k_x, (N, dim, H, W), jnp.float32)   # NCHW like PyTorch
    params = init_params(k_p, dim, mlp_ratio=4)

    out = mlp_forward(x, params)
    out = jax.block_until_ready(out)

    ref = jax.block_until_ready(mlp_reference(x, params))
    assert out.shape == (N, dim, H, W)
    # Tolerance is dominated by the bf16 MXU operands (reference uses f32 matmuls).
    assert jnp.allclose(out, ref, atol=2e-2, rtol=2e-2)
    print("KERNEL_OK")
</pallas_src>

<mosaic_0001>
module attributes {stable_mosaic.version = 11 : i64} {
  func.func @mlp_kernel(%arg0: i32, %arg1: i32, %arg2: memref<1x16x16x4xf32, #tpu.memory_space<vmem>>, %arg3: memref<1x4xf32, #tpu.memory_space<vmem>>, %arg4: memref<1x4xf32, #tpu.memory_space<vmem>>, %arg5: memref<4x16xbf16, #tpu.memory_space<vmem>>, %arg6: memref<1x16xf32, #tpu.memory_space<vmem>>, %arg7: memref<3x3x16xf32, #tpu.memory_space<vmem>>, %arg8: memref<1x16xf32, #tpu.memory_space<vmem>>, %arg9: memref<16x4xbf16, #tpu.memory_space<vmem>>, %arg10: memref<1x4xf32, #tpu.memory_space<vmem>>, %arg11: memref<1x8x16x4xf32, #tpu.memory_space<vmem>>, %arg12: memref<10x18x16xf32, #tpu.memory_space<vmem>>) attributes {dimension_semantics = [#tpu.dimension_semantics<parallel>, #tpu.dimension_semantics<parallel>], iteration_bounds = array<i64: 2, 2>, scalar_prefetch = 0 : i64, scratch_operands = 1 : i64, tpu.core_type = #tpu.core_type<tc>, window_params = [{transform_indices = @transform_0, window_bounds = array<i64: 1, 16, 16, 4>}, {pipeline_mode = #tpu.pipeline_mode<synchronous>, transform_indices = @transform_1, window_bounds = array<i64: 1, 4>}, {pipeline_mode = #tpu.pipeline_mode<synchronous>, transform_indices = @transform_2, window_bounds = array<i64: 1, 4>}, {pipeline_mode = #tpu.pipeline_mode<synchronous>, transform_indices = @transform_3, window_bounds = array<i64: 4, 16>}, {pipeline_mode = #tpu.pipeline_mode<synchronous>, transform_indices = @transform_4, window_bounds = array<i64: 1, 16>}, {pipeline_mode = #tpu.pipeline_mode<synchronous>, transform_indices = @transform_5, window_bounds = array<i64: 3, 3, 16>}, {pipeline_mode = #tpu.pipeline_mode<synchronous>, transform_indices = @transform_6, window_bounds = array<i64: 1, 16>}, {pipeline_mode = #tpu.pipeline_mode<synchronous>, transform_indices = @transform_7, window_bounds = array<i64: 16, 4>}, {pipeline_mode = #tpu.pipeline_mode<synchronous>, transform_indices = @transform_8, window_bounds = array<i64: 1, 4>}, {transform_indices = @transform_9, window_bounds = array<i64: 1, 8, 16, 4>}]} {
    %c8_i32 = arith.constant 8 : i32
    %0 = arith.muli %arg1, %c8_i32 : i32
    %1 = tpu.assume_multiple %0, 8 : i32
    %c0_i32 = arith.constant 0 : i32
    %2 = arith.cmpi sgt, %arg1, %c0_i32 : i32
    %c1_i32 = arith.constant 1 : i32
    %3 = arith.cmpi slt, %arg1, %c1_i32 : i32
    %c1_i32_0 = arith.constant 1 : i32
    %4 = arith.subi %1, %c1_i32_0 : i32
    %c0_i32_1 = arith.constant 0 : i32
    %5 = arith.maxsi %4, %c0_i32_1 : i32
    %c8_i32_2 = arith.constant 8 : i32
    %6 = arith.addi %1, %c8_i32_2 : i32
    %c15_i32 = arith.constant 15 : i32
    %7 = arith.minsi %6, %c15_i32 : i32
    %c0 = arith.constant 0 : index
    %8 = arith.index_cast %5 : i32 to index
    %c0_3 = arith.constant 0 : index
    %c0_4 = arith.constant 0 : index
    %9 = vector.load %arg2[%c0, %8, %c0_3, %c0_4] : memref<1x16x16x4xf32, #tpu.memory_space<vmem>>, vector<1x1x16x4xf32>
    %10 = vector.shape_cast %9 : vector<1x1x16x4xf32> to vector<1x16x4xf32>
    %c0_5 = arith.constant 0 : index
    %11 = arith.index_cast %1 : i32 to index
    %c0_6 = arith.constant 0 : index
    %c0_7 = arith.constant 0 : index
    %12 = vector.load %arg2[%c0_5, %11, %c0_6, %c0_7] : memref<1x16x16x4xf32, #tpu.memory_space<vmem>>, vector<1x8x16x4xf32>
    %13 = vector.shape_cast %12 : vector<1x8x16x4xf32> to vector<8x16x4xf32>
    %c0_8 = arith.constant 0 : index
    %14 = arith.index_cast %7 : i32 to index
    %c0_9 = arith.constant 0 : index
    %c0_10 = arith.constant 0 : index
    %15 = vector.load %arg2[%c0_8, %14, %c0_9, %c0_10] : memref<1x16x16x4xf32, #tpu.memory_space<vmem>>, vector<1x1x16x4xf32>
    %16 = vector.shape_cast %15 : vector<1x1x16x4xf32> to vector<1x16x4xf32>
    %17 = tpu.concatenate %10, %13, %16 in 0 : vector<1x16x4xf32>, vector<8x16x4xf32>, vector<1x16x4xf32> -> vector<10x16x4xf32>
    %cst = arith.constant dense<0.000000e+00> : vector<10x16xf32>
    %18 = vector.multi_reduction <add>, %17, %cst [2] : vector<10x16x4xf32> to vector<10x16xf32>
    %19 = vector.shape_cast %18 : vector<10x16xf32> to vector<10x16x1xf32>
    %cst_11 = arith.constant 4.000000e+00 : f32
    %20 = vector.broadcast %cst_11 : f32 to vector<10x16x1xf32>
    %21 = arith.divf %19, %20 : vector<10x16x1xf32>
    %22 = vector.broadcast %21 : vector<10x16x1xf32> to vector<10x16x4xf32>
    %23 = arith.subf %17, %22 : vector<10x16x4xf32>
    %24 = arith.mulf %23, %23 : vector<10x16x4xf32>
    %cst_12 = arith.constant dense<0.000000e+00> : vector<10x16xf32>
    %25 = vector.multi_reduction <add>, %24, %cst_12 [2] : vector<10x16x4xf32> to vector<10x16xf32>
    %26 = vector.shape_cast %25 : vector<10x16xf32> to vector<10x16x1xf32>
    %cst_13 = arith.constant 4.000000e+00 : f32
    %27 = vector.broadcast %cst_13 : f32 to vector<10x16x1xf32>
    %28 = arith.divf %26, %27 : vector<10x16x1xf32>
    %cst_14 = arith.constant 9.99999997E-7 : f32
    %29 = vector.broadcast %cst_14 : f32 to vector<10x16x1xf32>
    %30 = arith.addf %28, %29 : vector<10x16x1xf32>
    %31 = math.rsqrt %30 : vector<10x16x1xf32>
    %32 = vector.broadcast %31 : vector<10x16x1xf32> to vector<10x16x4xf32>
    %33 = arith.mulf %23, %32 : vector<10x16x4xf32>
    %c0_15 = arith.constant 0 : index
    %c0_16 = arith.constant 0 : index
    %34 = vector.load %arg3[%c0_15, %c0_16] : memref<1x4xf32, #tpu.memory_space<vmem>>, vector<1x4xf32>
    %35 = vector.shape_cast %34 : vector<1x4xf32> to vector<4xf32>
    %36 = vector.shape_cast %35 : vector<4xf32> to vector<1x1x4xf32>
    %37 = vector.broadcast %36 : vector<1x1x4xf32> to vector<10x16x4xf32>
    %38 = arith.mulf %33, %37 : vector<10x16x4xf32>
    %c0_17 = arith.constant 0 : index
    %c0_18 = arith.constant 0 : index
    %39 = vector.load %arg4[%c0_17, %c0_18] : memref<1x4xf32, #tpu.memory_space<vmem>>, vector<1x4xf32>
    %40 = vector.shape_cast %39 : vector<1x4xf32> to vector<4xf32>
    %41 = vector.shape_cast %40 : vector<4xf32> to vector<1x1x4xf32>
    %42 = vector.broadcast %41 : vector<1x1x4xf32> to vector<10x16x4xf32>
    %43 = arith.addf %38, %42 : vector<10x16x4xf32>
    %44 = vector.shape_cast %43 : vector<10x16x4xf32> to vector<160x4xf32>
    %45 = arith.truncf %44 : vector<160x4xf32> to vector<160x4xbf16>
    %c0_19 = arith.constant 0 : index
    %c0_20 = arith.constant 0 : index
    %46 = vector.load %arg5[%c0_19, %c0_20] : memref<4x16xbf16, #tpu.memory_space<vmem>>, vector<4x16xbf16>
    %cst_21 = arith.constant dense<0.000000e+00> : vector<160x16xf32>
    %47 = tpu.matmul %45, %46, %cst_21 {dimension_numbers = #tpu.dot_dimension_numbers<[1], [0], [0], [1], [0, 0, 1, 1], [], []>} : vector<160x4xbf16>, vector<4x16xbf16>, vector<160x16xf32> -> vector<160x16xf32>
    %c0_22 = arith.constant 0 : index
    %c0_23 = arith.constant 0 : index
    %48 = vector.load %arg6[%c0_22, %c0_23] : memref<1x16xf32, #tpu.memory_space<vmem>>, vector<1x16xf32>
    %49 = vector.shape_cast %48 : vector<1x16xf32> to vector<16xf32>
    %50 = vector.shape_cast %49 : vector<16xf32> to vector<1x16xf32>
    %51 = vector.broadcast %50 : vector<1x16xf32> to vector<160x16xf32>
    %52 = arith.addf %47, %51 : vector<160x16xf32>
    %cst_24 = arith.constant 5.000000e-01 : f32
    %53 = vector.broadcast %cst_24 : f32 to vector<160x16xf32>
    %54 = arith.mulf %53, %52 : vector<160x16xf32>
    %cst_25 = arith.constant 0.707106769 : f32
    %55 = vector.broadcast %cst_25 : f32 to vector<160x16xf32>
    %56 = arith.mulf %52, %55 : vector<160x16xf32>
    %cst_26 = arith.constant 0.000000e+00 : f32
    %57 = vector.broadcast %cst_26 : f32 to vector<160x16xf32>
    %58 = arith.cmpf oge, %56, %57 : vector<160x16xf32>
    %cst_27 = arith.constant 1.000000e+00 : f32
    %cst_28 = arith.constant -1.000000e+00 : f32
    %59 = vector.broadcast %cst_27 : f32 to vector<160x16xf32>
    %60 = vector.broadcast %cst_28 : f32 to vector<160x16xf32>
    %61 = arith.select %58, %59, %60 : vector<160x16xi1>, vector<160x16xf32>
    %62 = math.absf %56 : vector<160x16xf32>
    %cst_29 = arith.constant 0.327591091 : f32
    %63 = vector.broadcast %cst_29 : f32 to vector<160x16xf32>
    %64 = arith.mulf %63, %62 : vector<160x16xf32>
    %cst_30 = arith.constant 1.000000e+00 : f32
    %65 = vector.broadcast %cst_30 : f32 to vector<160x16xf32>
    %66 = arith.addf %65, %64 : vector<160x16xf32>
    %67 = tpu.reciprocal %66 {approx = true} : vector<160x16xf32> -> vector<160x16xf32>
    %cst_31 = arith.constant 1.06140542 : f32
    %68 = vector.broadcast %cst_31 : f32 to vector<160x16xf32>
    %69 = arith.mulf %68, %67 : vector<160x16xf32>
    %cst_32 = arith.constant -1.45315206 : f32
    %70 = vector.broadcast %cst_32 : f32 to vector<160x16xf32>
    %71 = arith.addf %69, %70 : vector<160x16xf32>
    %72 = arith.mulf %71, %67 : vector<160x16xf32>
    %cst_33 = arith.constant 1.42141378 : f32
    %73 = vector.broadcast %cst_33 : f32 to vector<160x16xf32>
    %74 = arith.addf %72, %73 : vector<160x16xf32>
    %75 = arith.mulf %74, %67 : vector<160x16xf32>
    %cst_34 = arith.constant -0.284496725 : f32
    %76 = vector.broadcast %cst_34 : f32 to vector<160x16xf32>
    %77 = arith.addf %75, %76 : vector<160x16xf32>
    %78 = arith.mulf %77, %67 : vector<160x16xf32>
    %cst_35 = arith.constant 0.254829586 : f32
    %79 = vector.broadcast %cst_35 : f32 to vector<160x16xf32>
    %80 = arith.addf %78, %79 : vector<160x16xf32>
    %81 = arith.mulf %80, %67 : vector<160x16xf32>
    %cst_36 = arith.constant 0.000000e+00 : f32
    %82 = vector.broadcast %cst_36 : f32 to vector<160x16xf32>
    %83 = arith.subf %82, %62 : vector<160x16xf32>
    %84 = arith.mulf %83, %62 : vector<160x16xf32>
    %85 = math.exp %84 : vector<160x16xf32>
    %86 = arith.mulf %81, %85 : vector<160x16xf32>
    %cst_37 = arith.constant 1.000000e+00 : f32
    %87 = vector.broadcast %cst_37 : f32 to vector<160x16xf32>
    %88 = arith.subf %87, %86 : vector<160x16xf32>
    %89 = arith.mulf %61, %88 : vector<160x16xf32>
    %cst_38 = arith.constant 1.000000e+00 : f32
    %90 = vector.broadcast %cst_38 : f32 to vector<160x16xf32>
    %91 = arith.addf %90, %89 : vector<160x16xf32>
    %92 = arith.mulf %54, %91 : vector<160x16xf32>
    %93 = vector.shape_cast %92 : vector<160x16xf32> to vector<10x16x16xf32>
    %94 = tpu.iota {dimensions = array<i32: 0>} : vector<10x16x16xi32>
    %c0_i32_39 = arith.constant 0 : i32
    %95 = vector.broadcast %c0_i32_39 : i32 to vector<10x16x16xi32>
    %96 = arith.cmpi ne, %94, %95 : vector<10x16x16xi32>
    %97 = vector.broadcast %2 : i1 to vector<10x16x16xi1>
    %98 = arith.ori %96, %97 : vector<10x16x16xi1>
    %c9_i32 = arith.constant 9 : i32
    %99 = vector.broadcast %c9_i32 : i32 to vector<10x16x16xi32>
    %100 = arith.cmpi ne, %94, %99 : vector<10x16x16xi32>
    %101 = vector.broadcast %3 : i1 to vector<10x16x16xi1>
    %102 = arith.ori %100, %101 : vector<10x16x16xi1>
    %103 = arith.andi %98, %102 : vector<10x16x16xi1>
    %cst_40 = arith.constant 0.000000e+00 : f32
    %104 = vector.broadcast %cst_40 : f32 to vector<10x16x16xf32>
    %105 = arith.select %103, %93, %104 : vector<10x16x16xi1>, vector<10x16x16xf32>
    %cst_41 = arith.constant 0.000000e+00 : f32
    %106 = vector.broadcast %cst_41 : f32 to vector<10x1x16xf32>
    %c0_42 = arith.constant 0 : index
    %c0_43 = arith.constant 0 : index
    %c0_44 = arith.constant 0 : index
    %107 = vector.load %arg12[%c0_42, %c0_43, %c0_44] : memref<10x18x16xf32, #tpu.memory_space<vmem>>, vector<10x1x16xf32>
    tpu.vector_store %arg12[%c0_42, %c0_43, %c0_44], %106 {strides = array<i32>} : memref<10x18x16xf32, #tpu.memory_space<vmem>>, vector<10x1x16xf32>,
    %cst_45 = arith.constant 0.000000e+00 : f32
    %108 = vector.broadcast %cst_45 : f32 to vector<10x1x16xf32>
    %c0_46 = arith.constant 0 : index
    %c17 = arith.constant 17 : index
    %c0_47 = arith.constant 0 : index
    %109 = vector.load %arg12[%c0_46, %c17, %c0_47] : memref<10x18x16xf32, #tpu.memory_space<vmem>>, vector<10x1x16xf32>
    tpu.vector_store %arg12[%c0_46, %c17, %c0_47], %108 {strides = array<i32>} : memref<10x18x16xf32, #tpu.memory_space<vmem>>, vector<10x1x16xf32>,
    %c0_48 = arith.constant 0 : index
    %c1 = arith.constant 1 : index
    %c0_49 = arith.constant 0 : index
    %110 = vector.load %arg12[%c0_48, %c1, %c0_49] : memref<10x18x16xf32, #tpu.memory_space<vmem>>, vector<10x16x16xf32>
    tpu.vector_store %arg12[%c0_48, %c1, %c0_49], %105 {strides = array<i32>} : memref<10x18x16xf32, #tpu.memory_space<vmem>>, vector<10x16x16xf32>,
    %c0_50 = arith.constant 0 : index
    %c0_51 = arith.constant 0 : index
    %c0_52 = arith.constant 0 : index
    %111 = vector.load %arg7[%c0_50, %c0_51, %c0_52] : memref<3x3x16xf32, #tpu.memory_space<vmem>>, vector<3x3x16xf32>
    %c0_53 = arith.constant 0 : index
    %c0_54 = arith.constant 0 : index
    %c0_55 = arith.constant 0 : index
    %112 = vector.load %arg12[%c0_53, %c0_54, %c0_55] : memref<10x18x16xf32, #tpu.memory_space<vmem>>, vector<8x16x16xf32>
    %113 = vector.extract_strided_slice %111 {offsets = [0, 0, 0], sizes = [1, 1, 16], strides = [1, 1, 1]} : vector<3x3x16xf32> to vector<1x1x16xf32>
    %114 = vector.shape_cast %113 : vector<1x1x16xf32> to vector<16xf32>
    %115 = vector.shape_cast %114 : vector<16xf32> to vector<1x1x16xf32>
    %116 = vector.broadcast %115 : vector<1x1x16xf32> to vector<8x16x16xf32>
    %117 = arith.mulf %112, %116 : vector<8x16x16xf32>
    %c0_56 = arith.constant 0 : index
    %c1_57 = arith.constant 1 : index
    %c0_58 = arith.constant 0 : index
    %118 = vector.load %arg12[%c0_56, %c1_57, %c0_58] : memref<10x18x16xf32, #tpu.memory_space<vmem>>, vector<8x16x16xf32>
    %119 = vector.extract_strided_slice %111 {offsets = [0, 1, 0], sizes = [1, 1, 16], strides = [1, 1, 1]} : vector<3x3x16xf32> to vector<1x1x16xf32>
    %120 = vector.shape_cast %119 : vector<1x1x16xf32> to vector<16xf32>
    %121 = vector.shape_cast %120 : vector<16xf32> to vector<1x1x16xf32>
    %122 = vector.broadcast %121 : vector<1x1x16xf32> to vector<8x16x16xf32>
    %123 = arith.mulf %118, %122 : vector<8x16x16xf32>
    %124 = arith.addf %117, %123 : vector<8x16x16xf32>
    %c0_59 = arith.constant 0 : index
    %c2 = arith.constant 2 : index
    %c0_60 = arith.constant 0 : index
    %125 = vector.load %arg12[%c0_59, %c2, %c0_60] : memref<10x18x16xf32, #tpu.memory_space<vmem>>, vector<8x16x16xf32>
    %126 = vector.extract_strided_slice %111 {offsets = [0, 2, 0], sizes = [1, 1, 16], strides = [1, 1, 1]} : vector<3x3x16xf32> to vector<1x1x16xf32>
    %127 = vector.shape_cast %126 : vector<1x1x16xf32> to vector<16xf32>
    %128 = vector.shape_cast %127 : vector<16xf32> to vector<1x1x16xf32>
    %129 = vector.broadcast %128 : vector<1x1x16xf32> to vector<8x16x16xf32>
    %130 = arith.mulf %125, %129 : vector<8x16x16xf32>
    %131 = arith.addf %124, %130 : vector<8x16x16xf32>
    %c1_61 = arith.constant 1 : index
    %c0_62 = arith.constant 0 : index
    %c0_63 = arith.constant 0 : index
    %132 = vector.load %arg12[%c1_61, %c0_62, %c0_63] : memref<10x18x16xf32, #tpu.memory_space<vmem>>, vector<8x16x16xf32>
    %133 = vector.extract_strided_slice %111 {offsets = [1, 0, 0], sizes = [1, 1, 16], strides = [1, 1, 1]} : vector<3x3x16xf32> to vector<1x1x16xf32>
    %134 = vector.shape_cast %133 : vector<1x1x16xf32> to vector<16xf32>
    %135 = vector.shape_cast %134 : vector<16xf32> to vector<1x1x16xf32>
    %136 = vector.broadcast %135 : vector<1x1x16xf32> to vector<8x16x16xf32>
    %137 = arith.mulf %132, %136 : vector<8x16x16xf32>
    %c1_64 = arith.constant 1 : index
    %c1_65 = arith.constant 1 : index
    %c0_66 = arith.constant 0 : index
    %138 = vector.load %arg12[%c1_64, %c1_65, %c0_66] : memref<10x18x16xf32, #tpu.memory_space<vmem>>, vector<8x16x16xf32>
    %139 = vector.extract_strided_slice %111 {offsets = [1, 1, 0], sizes = [1, 1, 16], strides = [1, 1, 1]} : vector<3x3x16xf32> to vector<1x1x16xf32>
    %140 = vector.shape_cast %139 : vector<1x1x16xf32> to vector<16xf32>
    %141 = vector.shape_cast %140 : vector<16xf32> to vector<1x1x16xf32>
    %142 = vector.broadcast %141 : vector<1x1x16xf32> to vector<8x16x16xf32>
    %143 = arith.mulf %138, %142 : vector<8x16x16xf32>
    %144 = arith.addf %137, %143 : vector<8x16x16xf32>
    %c1_67 = arith.constant 1 : index
    %c2_68 = arith.constant 2 : index
    %c0_69 = arith.constant 0 : index
    %145 = vector.load %arg12[%c1_67, %c2_68, %c0_69] : memref<10x18x16xf32, #tpu.memory_space<vmem>>, vector<8x16x16xf32>
    %146 = vector.extract_strided_slice %111 {offsets = [1, 2, 0], sizes = [1, 1, 16], strides = [1, 1, 1]} : vector<3x3x16xf32> to vector<1x1x16xf32>
    %147 = vector.shape_cast %146 : vector<1x1x16xf32> to vector<16xf32>
    %148 = vector.shape_cast %147 : vector<16xf32> to vector<1x1x16xf32>
    %149 = vector.broadcast %148 : vector<1x1x16xf32> to vector<8x16x16xf32>
    %150 = arith.mulf %145, %149 : vector<8x16x16xf32>
    %151 = arith.addf %144, %150 : vector<8x16x16xf32>
    %c2_70 = arith.constant 2 : index
    %c0_71 = arith.constant 0 : index
    %c0_72 = arith.constant 0 : index
    %152 = vector.load %arg12[%c2_70, %c0_71, %c0_72] : memref<10x18x16xf32, #tpu.memory_space<vmem>>, vector<8x16x16xf32>
    %153 = vector.extract_strided_slice %111 {offsets = [2, 0, 0], sizes = [1, 1, 16], strides = [1, 1, 1]} : vector<3x3x16xf32> to vector<1x1x16xf32>
    %154 = vector.shape_cast %153 : vector<1x1x16xf32> to vector<16xf32>
    %155 = vector.shape_cast %154 : vector<16xf32> to vector<1x1x16xf32>
    %156 = vector.broadcast %155 : vector<1x1x16xf32> to vector<8x16x16xf32>
    %157 = arith.mulf %152, %156 : vector<8x16x16xf32>
    %c2_73 = arith.constant 2 : index
    %c1_74 = arith.constant 1 : index
    %c0_75 = arith.constant 0 : index
    %158 = vector.load %arg12[%c2_73, %c1_74, %c0_75] : memref<10x18x16xf32, #tpu.memory_space<vmem>>, vector<8x16x16xf32>
    %159 = vector.extract_strided_slice %111 {offsets = [2, 1, 0], sizes = [1, 1, 16], strides = [1, 1, 1]} : vector<3x3x16xf32> to vector<1x1x16xf32>
    %160 = vector.shape_cast %159 : vector<1x1x16xf32> to vector<16xf32>
    %161 = vector.shape_cast %160 : vector<16xf32> to vector<1x1x16xf32>
    %162 = vector.broadcast %161 : vector<1x1x16xf32> to vector<8x16x16xf32>
    %163 = arith.mulf %158, %162 : vector<8x16x16xf32>
    %164 = arith.addf %157, %163 : vector<8x16x16xf32>
    %c2_76 = arith.constant 2 : index
    %c2_77 = arith.constant 2 : index
    %c0_78 = arith.constant 0 : index
    %165 = vector.load %arg12[%c2_76, %c2_77, %c0_78] : memref<10x18x16xf32, #tpu.memory_space<vmem>>, vector<8x16x16xf32>
    %166 = vector.extract_strided_slice %111 {offsets = [2, 2, 0], sizes = [1, 1, 16], strides = [1, 1, 1]} : vector<3x3x16xf32> to vector<1x1x16xf32>
    %167 = vector.shape_cast %166 : vector<1x1x16xf32> to vector<16xf32>
    %168 = vector.shape_cast %167 : vector<16xf32> to vector<1x1x16xf32>
    %169 = vector.broadcast %168 : vector<1x1x16xf32> to vector<8x16x16xf32>
    %170 = arith.mulf %165, %169 : vector<8x16x16xf32>
    %171 = arith.addf %164, %170 : vector<8x16x16xf32>
    %c0_79 = arith.constant 0 : index
    %c0_80 = arith.constant 0 : index
    %172 = vector.load %arg8[%c0_79, %c0_80] : memref<1x16xf32, #tpu.memory_space<vmem>>, vector<1x16xf32>
    %173 = vector.shape_cast %172 : vector<1x16xf32> to vector<16xf32>
    %174 = arith.addf %131, %151 : vector<8x16x16xf32>
    %175 = vector.shape_cast %173 : vector<16xf32> to vector<1x1x16xf32>
    %176 = vector.broadcast %175 : vector<1x1x16xf32> to vector<8x16x16xf32>
    %177 = arith.addf %176, %174 : vector<8x16x16xf32>
    %178 = arith.addf %177, %171 : vector<8x16x16xf32>
    %179 = vector.extract_strided_slice %93 {offsets = [1, 0, 0], sizes = [8, 16, 16], strides = [1, 1, 1]} : vector<10x16x16xf32> to vector<8x16x16xf32>
    %cst_81 = arith.constant 5.000000e-01 : f32
    %180 = vector.broadcast %cst_81 : f32 to vector<8x16x16xf32>
    %181 = arith.mulf %180, %178 : vector<8x16x16xf32>
    %cst_82 = arith.constant 0.707106769 : f32
    %182 = vector.broadcast %cst_82 : f32 to vector<8x16x16xf32>
    %183 = arith.mulf %178, %182 : vector<8x16x16xf32>
    %cst_83 = arith.constant 0.000000e+00 : f32
    %184 = vector.broadcast %cst_83 : f32 to vector<8x16x16xf32>
    %185 = arith.cmpf oge, %183, %184 : vector<8x16x16xf32>
    %cst_84 = arith.constant 1.000000e+00 : f32
    %cst_85 = arith.constant -1.000000e+00 : f32
    %186 = vector.broadcast %cst_84 : f32 to vector<8x16x16xf32>
    %187 = vector.broadcast %cst_85 : f32 to vector<8x16x16xf32>
    %188 = arith.select %185, %186, %187 : vector<8x16x16xi1>, vector<8x16x16xf32>
    %189 = math.absf %183 : vector<8x16x16xf32>
    %cst_86 = arith.constant 0.327591091 : f32
    %190 = vector.broadcast %cst_86 : f32 to vector<8x16x16xf32>
    %191 = arith.mulf %190, %189 : vector<8x16x16xf32>
    %cst_87 = arith.constant 1.000000e+00 : f32
    %192 = vector.broadcast %cst_87 : f32 to vector<8x16x16xf32>
    %193 = arith.addf %192, %191 : vector<8x16x16xf32>
    %194 = tpu.reciprocal %193 {approx = true} : vector<8x16x16xf32> -> vector<8x16x16xf32>
    %cst_88 = arith.constant 1.06140542 : f32
    %195 = vector.broadcast %cst_88 : f32 to vector<8x16x16xf32>
    %196 = arith.mulf %195, %194 : vector<8x16x16xf32>
    %cst_89 = arith.constant -1.45315206 : f32
    %197 = vector.broadcast %cst_89 : f32 to vector<8x16x16xf32>
    %198 = arith.addf %196, %197 : vector<8x16x16xf32>
    %199 = arith.mulf %198, %194 : vector<8x16x16xf32>
    %cst_90 = arith.constant 1.42141378 : f32
    %200 = vector.broadcast %cst_90 : f32 to vector<8x16x16xf32>
    %201 = arith.addf %199, %200 : vector<8x16x16xf32>
    %202 = arith.mulf %201, %194 : vector<8x16x16xf32>
    %cst_91 = arith.constant -0.284496725 : f32
    %203 = vector.broadcast %cst_91 : f32 to vector<8x16x16xf32>
    %204 = arith.addf %202, %203 : vector<8x16x16xf32>
    %205 = arith.mulf %204, %194 : vector<8x16x16xf32>
    %cst_92 = arith.constant 0.254829586 : f32
    %206 = vector.broadcast %cst_92 : f32 to vector<8x16x16xf32>
    %207 = arith.addf %205, %206 : vector<8x16x16xf32>
    %208 = arith.mulf %207, %194 : vector<8x16x16xf32>
    %cst_93 = arith.constant 0.000000e+00 : f32
    %209 = vector.broadcast %cst_93 : f32 to vector<8x16x16xf32>
    %210 = arith.subf %209, %189 : vector<8x16x16xf32>
    %211 = arith.mulf %210, %189 : vector<8x16x16xf32>
    %212 = math.exp %211 : vector<8x16x16xf32>
    %213 = arith.mulf %208, %212 : vector<8x16x16xf32>
    %cst_94 = arith.constant 1.000000e+00 : f32
    %214 = vector.broadcast %cst_94 : f32 to vector<8x16x16xf32>
    %215 = arith.subf %214, %213 : vector<8x16x16xf32>
    %216 = arith.mulf %188, %215 : vector<8x16x16xf32>
    %cst_95 = arith.constant 1.000000e+00 : f32
    %217 = vector.broadcast %cst_95 : f32 to vector<8x16x16xf32>
    %218 = arith.addf %217, %216 : vector<8x16x16xf32>
    %219 = arith.mulf %181, %218 : vector<8x16x16xf32>
    %220 = arith.addf %179, %219 : vector<8x16x16xf32>
    %221 = vector.shape_cast %220 : vector<8x16x16xf32> to vector<128x16xf32>
    %222 = arith.truncf %221 : vector<128x16xf32> to vector<128x16xbf16>
    %c0_96 = arith.constant 0 : index
    %c0_97 = arith.constant 0 : index
    %223 = vector.load %arg9[%c0_96, %c0_97] : memref<16x4xbf16, #tpu.memory_space<vmem>>, vector<16x4xbf16>
    %cst_98 = arith.constant dense<0.000000e+00> : vector<128x4xf32>
    %224 = tpu.matmul %222, %223, %cst_98 {dimension_numbers = #tpu.dot_dimension_numbers<[1], [0], [0], [1], [0, 0, 1, 1], [], []>} : vector<128x16xbf16>, vector<16x4xbf16>, vector<128x4xf32> -> vector<128x4xf32>
    %c0_99 = arith.constant 0 : index
    %c0_100 = arith.constant 0 : index
    %225 = vector.load %arg10[%c0_99, %c0_100] : memref<1x4xf32, #tpu.memory_space<vmem>>, vector<1x4xf32>
    %226 = vector.shape_cast %225 : vector<1x4xf32> to vector<4xf32>
    %227 = vector.shape_cast %226 : vector<4xf32> to vector<1x4xf32>
    %228 = vector.broadcast %227 : vector<1x4xf32> to vector<128x4xf32>
    %229 = arith.addf %224, %228 : vector<128x4xf32>
    %230 = vector.shape_cast %229 : vector<128x4xf32> to vector<8x16x4xf32>
    %c0_101 = arith.constant 0 : index
    %c0_102 = arith.constant 0 : index
    %c0_103 = arith.constant 0 : index
    %c0_104 = arith.constant 0 : index
    %231 = vector.load %arg11[%c0_101, %c0_102, %c0_103, %c0_104] : memref<1x8x16x4xf32, #tpu.memory_space<vmem>>, vector<1x8x16x4xf32>
    %232 = vector.shape_cast %231 : vector<1x8x16x4xf32> to vector<8x16x4xf32>
    %233 = vector.shape_cast %230 : vector<8x16x4xf32> to vector<1x8x16x4xf32>
    tpu.vector_store %arg11[%c0_101, %c0_102, %c0_103, %c0_104], %233 {strides = array<i32>} : memref<1x8x16x4xf32, #tpu.memory_space<vmem>>, vector<1x8x16x4xf32>,
    return
  }
  func.func @transform_0(%arg0: i32, %arg1: i32) -> (i32, i32, i32, i32) {
    %c0_i32 = arith.constant 0 : i32
    %c0_i32_0 = arith.constant 0 : i32
    %c0_i32_1 = arith.constant 0 : i32
    %c0_i32_2 = arith.constant 0 : i32
    return %arg0, %c0_i32, %c0_i32_0, %c0_i32_1 : i32, i32, i32, i32
  }
  func.func @transform_1(%arg0: i32, %arg1: i32) -> (i32, i32) {
    %c0_i32 = arith.constant 0 : i32
    %c0_i32_0 = arith.constant 0 : i32
    %c0_i32_1 = arith.constant 0 : i32
    return %c0_i32, %c0_i32_0 : i32, i32
  }
  func.func @transform_2(%arg0: i32, %arg1: i32) -> (i32, i32) {
    %c0_i32 = arith.constant 0 : i32
    %c0_i32_0 = arith.constant 0 : i32
    %c0_i32_1 = arith.constant 0 : i32
    return %c0_i32, %c0_i32_0 : i32, i32
  }
  func.func @transform_3(%arg0: i32, %arg1: i32) -> (i32, i32) {
    %c0_i32 = arith.constant 0 : i32
    %c0_i32_0 = arith.constant 0 : i32
    %c0_i32_1 = arith.constant 0 : i32
    return %c0_i32, %c0_i32_0 : i32, i32
  }
  func.func @transform_4(%arg0: i32, %arg1: i32) -> (i32, i32) {
    %c0_i32 = arith.constant 0 : i32
    %c0_i32_0 = arith.constant 0 : i32
    %c0_i32_1 = arith.constant 0 : i32
    return %c0_i32, %c0_i32_0 : i32, i32
  }
  func.func @transform_5(%arg0: i32, %arg1: i32) -> (i32, i32, i32) {
    %c0_i32 = arith.constant 0 : i32
    %c0_i32_0 = arith.constant 0 : i32
    %c0_i32_1 = arith.constant 0 : i32
    %c0_i32_2 = arith.constant 0 : i32
    return %c0_i32, %c0_i32_0, %c0_i32_1 : i32, i32, i32
  }
  func.func @transform_6(%arg0: i32, %arg1: i32) -> (i32, i32) {
    %c0_i32 = arith.constant 0 : i32
    %c0_i32_0 = arith.constant 0 : i32
    %c0_i32_1 = arith.constant 0 : i32
    return %c0_i32, %c0_i32_0 : i32, i32
  }
  func.func @transform_7(%arg0: i32, %arg1: i32) -> (i32, i32) {
    %c0_i32 = arith.constant 0 : i32
    %c0_i32_0 = arith.constant 0 : i32
    %c0_i32_1 = arith.constant 0 : i32
    return %c0_i32, %c0_i32_0 : i32, i32
  }
  func.func @transform_8(%arg0: i32, %arg1: i32) -> (i32, i32) {
    %c0_i32 = arith.constant 0 : i32
    %c0_i32_0 = arith.constant 0 : i32
    %c0_i32_1 = arith.constant 0 : i32
    return %c0_i32, %c0_i32_0 : i32, i32
  }
  func.func @transform_9(%arg0: i32, %arg1: i32) -> (i32, i32, i32, i32) {
    %c0_i32 = arith.constant 0 : i32
    %c0_i32_0 = arith.constant 0 : i32
    %c0_i32_1 = arith.constant 0 : i32
    return %arg0, %arg1, %c0_i32, %c0_i32_0 : i32, i32, i32, i32
  }
}

</mosaic_0001>

<llo_original>
// kernel: tpu_custom_call.1
$region0: #{tpu_custom_call.1}
  #allocation0 [shape = 'u32[]', space=smem, size = 0x4, offset = 0x4, fixed_abs, tag = 'smem constant byte address 0x4 - core index']
  #allocation1 [shape = 'u32[144,128]{1,0:T(1,128)}', space=vmem, size = 0x12000, scoped, tag = 'internal scratch']
  #allocation2 [shape = 'f32[10,18,16]{2,1,0:T(8,128)}', space=vmem, size = 0x1e000, scoped, tag = 'scratch operand']
  %s0 = inlined_call_operand.vmem [shape: f32[2,16,16,4], index: 0, kind: input, shape index: {}]
  %s1 = inlined_call_operand.vmem [shape: f32[1,4], index: 1, kind: input, shape index: {}]
  %s2 = inlined_call_operand.vmem [shape: f32[1,4], index: 2, kind: input, shape index: {}]
  %s3 = inlined_call_operand.vmem [shape: bf16[4,16], index: 3, kind: input, shape index: {}]
  %s4 = inlined_call_operand.vmem [shape: f32[1,16], index: 4, kind: input, shape index: {}]
  %s5 = inlined_call_operand.vmem [shape: f32[3,3,16], index: 5, kind: input, shape index: {}]
  %s6 = inlined_call_operand.vmem [shape: f32[1,16], index: 6, kind: input, shape index: {}]
  %s7 = inlined_call_operand.vmem [shape: bf16[16,4], index: 7, kind: input, shape index: {}]
  %s8 = inlined_call_operand.vmem [shape: f32[1,4], index: 8, kind: input, shape index: {}]
  %s9 = inlined_call_operand.vmem [shape: f32[2,16,16,4], index: 9, kind: output, shape index: {}]
  %s10 = sld [smem:[#allocation0]]
  $region69: #{tpu_custom_call.1} parent=0
    _
  %s12 = ssub.s32 1, %s10
  %s13 = scalar_select 0, %s12, %s10
  loop: start=0, step=1, limit=6
  $region2: #{tpu_custom_call.1} parent=0 // loop_pre_header
    _
  $region3: #{tpu_custom_call.1} parent=0 // loop_header
    %s15 = sphi 0, %s19
    %p16 = scmp.ge.s32.totalorder %s15, 6
    %s22 = sphi 0, %s34
    %s23 = sphi 0, %s30
    %s24 = sphi 0, %s22
    %s25 = sphi 0, %s23
    %s26 = sphi 0, %s24
    %s27 = sphi 0, %s25
    %s37 = sphi 0, %s39
    %s40 = sphi 0, %s37
    %s41 = sphi 0, %s40
    %s57 = sphi 0, %s41
    %s61 = sphi 0, %s61
    %s63 = sphi 0, %s61
    %s64 = sphi 0, %s63
    %s78 = sphi 0, %s64
    %s82 = sphi 0, %s82
    %s84 = sphi 0, %s82
    %s85 = sphi 0, %s84
    %s99 = sphi 0, %s85
    %s103 = sphi 0, %s103
    %s105 = sphi 0, %s103
    %s106 = sphi 0, %s105
    %s120 = sphi 0, %s106
    %s124 = sphi 0, %s124
    %s126 = sphi 0, %s124
    %s127 = sphi 0, %s126
    %s141 = sphi 0, %s127
    %s145 = sphi 0, %s145
    %s147 = sphi 0, %s145
    %s148 = sphi 0, %s147
    %s162 = sphi 0, %s148
    %s166 = sphi 0, %s166
    %s168 = sphi 0, %s166
    %s169 = sphi 0, %s168
    %s183 = sphi 0, %s169
    %s187 = sphi 0, %s187
    %s189 = sphi 0, %s187
    %s190 = sphi 0, %s189
    %s204 = sphi 0, %s190
    %s208 = sphi 0, %s208
    %s210 = sphi 0, %s208
    %s211 = sphi 0, %s210
    %s225 = sphi 0, %s211
    %s233 = sphi 0, %s235
    %s236 = sphi 0, %s233
    %s237 = sphi 0, %s236
    %s253 = sphi 0, %s237
  $region4: #{tpu_custom_call.1} parent=0 // loop_header_branch
    %18 = sbr.rel (%p16) target = $region8
  $region5: #{tpu_custom_call.1} parent=0 // loop_body
    %s20 = ssub.s32 %s15, 1
    %s21 = ssub.s32 %s15, 2
    %s28 = sadd.s32 1, %s23
    %p29 = scmp.ge.s32.totalorder %s28, 2
    %s30 = scalar_select %p29, 0, %s28
    %s31 = sadd.s32 1, %s22
    %s32 = scalar_select %p29, %s31, %s22
    %p33 = scmp.ge.s32.totalorder %s32, 2
    %s34 = scalar_select %p33, 0, %s32
    %s35 = ssub.s32 %s22, %s34
    %p36 = scmp.eq.s32.totalorder %s35, 0
    %s38 = sadd.s32 %s37, 1
    %s39 = scalar_select %p36, %s37, %s38
    %p42 = pneg %p36
    %p43 = scmp.eq.s32.totalorder %s15, 3
    %p44 = por %p42, %p43
    %p45 = scmp.ne.s32.totalorder %s37, %s40
    %p46 = scmp.eq.s32.totalorder %s15, 0
    %p47 = por %p45, %p46
    %p48 = scmp.ne.s32.totalorder %s37, %s40
    %p49 = scmp.eq.s32.totalorder %s20, 3
    %p50 = por %p48, %p49
    %p51 = scmp.ne.s32.totalorder %s40, %s41
    %p52 = scmp.eq.s32.totalorder %s20, 0
    %p53 = por %p51, %p52
    %p54 = scmp.ne.s32.totalorder %s40, %s41
    %p55 = scmp.eq.s32.totalorder %s21, 3
    %p56 = por %p54, %p55
    %p58 = scmp.ne.s32.totalorder %s41, %s57
    %p59 = scmp.eq.s32.totalorder %s21, 0
    %p60 = por %p58, %p59
    %s62 = sadd.s32 %s61, 1
    %p65 = scmp.eq.s32.totalorder %s15, 3
    %p66 = scmp.ne.s32.totalorder %s61, %s63
    %p67 = scmp.eq.s32.totalorder %s15, 0
    %p68 = por %p66, %p67
    %p69 = scmp.ne.s32.totalorder %s61, %s63
    %p70 = scmp.eq.s32.totalorder %s20, 3
    %p71 = por %p69, %p70
    %p72 = scmp.ne.s32.totalorder %s63, %s64
    %p73 = scmp.eq.s32.totalorder %s20, 0
    %p74 = por %p72, %p73
    %p75 = scmp.ne.s32.totalorder %s63, %s64
    %p76 = scmp.eq.s32.totalorder %s21, 3
    %p77 = por %p75, %p76
    %p79 = scmp.ne.s32.totalorder %s64, %s78
    %p80 = scmp.eq.s32.totalorder %s21, 0
    %p81 = por %p79, %p80
    %s83 = sadd.s32 %s82, 1
    %p86 = scmp.eq.s32.totalorder %s15, 3
    %p87 = scmp.ne.s32.totalorder %s82, %s84
    %p88 = scmp.eq.s32.totalorder %s15, 0
    %p89 = por %p87, %p88
    %p90 = scmp.ne.s32.totalorder %s82, %s84
    %p91 = scmp.eq.s32.totalorder %s20, 3
    %p92 = por %p90, %p91
    %p93 = scmp.ne.s32.totalorder %s84, %s85
    %p94 = scmp.eq.s32.totalorder %s20, 0
    %p95 = por %p93, %p94
    %p96 = scmp.ne.s32.totalorder %s84, %s85
    %p97 = scmp.eq.s32.totalorder %s21, 3
    %p98 = por %p96, %p97
    %p100 = scmp.ne.s32.totalorder %s85, %s99
    %p101 = scmp.eq.s32.totalorder %s21, 0
    %p102 = por %p100, %p101
    %s104 = sadd.s32 %s103, 1
    %p107 = scmp.eq.s32.totalorder %s15, 3
    %p108 = scmp.ne.s32.totalorder %s103, %s105
    %p109 = scmp.eq.s32.totalorder %s15, 0
    %p110 = por %p108, %p109
    %p111 = scmp.ne.s32.totalorder %s103, %s105
    %p112 = scmp.eq.s32.totalorder %s20, 3
    %p113 = por %p111, %p112
    %p114 = scmp.ne.s32.totalorder %s105, %s106
    %p115 = scmp.eq.s32.totalorder %s20, 0
    %p116 = por %p114, %p115
    %p117 = scmp.ne.s32.totalorder %s105, %s106
    %p118 = scmp.eq.s32.totalorder %s21, 3
    %p119 = por %p117, %p118
    %p121 = scmp.ne.s32.totalorder %s106, %s120
    %p122 = scmp.eq.s32.totalorder %s21, 0
    %p123 = por %p121, %p122
    %s125 = sadd.s32 %s124, 1
    %p128 = scmp.eq.s32.totalorder %s15, 3
    %p129 = scmp.ne.s32.totalorder %s124, %s126
    %p130 = scmp.eq.s32.totalorder %s15, 0
    %p131 = por %p129, %p130
    %p132 = scmp.ne.s32.totalorder %s124, %s126
    %p133 = scmp.eq.s32.totalorder %s20, 3
    %p134 = por %p132, %p133
    %p135 = scmp.ne.s32.totalorder %s126, %s127
    %p136 = scmp.eq.s32.totalorder %s20, 0
    %p137 = por %p135, %p136
    %p138 = scmp.ne.s32.totalorder %s126, %s127
    %p139 = scmp.eq.s32.totalorder %s21, 3
    %p140 = por %p138, %p139
    %p142 = scmp.ne.s32.totalorder %s127, %s141
    %p143 = scmp.eq.s32.totalorder %s21, 0
    %p144 = por %p142, %p143
    %s146 = sadd.s32 %s145, 1
    %p149 = scmp.eq.s32.totalorder %s15, 3
    %p150 = scmp.ne.s32.totalorder %s145, %s147
    %p151 = scmp.eq.s32.totalorder %s15, 0
    %p152 = por %p150, %p151
    %p153 = scmp.ne.s32.totalorder %s145, %s147
    %p154 = scmp.eq.s32.totalorder %s20, 3
    %p155 = por %p153, %p154
    %p156 = scmp.ne.s32.totalorder %s147, %s148
    %p157 = scmp.eq.s32.totalorder %s20, 0
    %p158 = por %p156, %p157
    %p159 = scmp.ne.s32.totalorder %s147, %s148
    %p160 = scmp.eq.s32.totalorder %s21, 3
    %p161 = por %p159, %p160
    %p163 = scmp.ne.s32.totalorder %s148, %s162
    %p164 = scmp.eq.s32.totalorder %s21, 0
    %p165 = por %p163, %p164
    %s167 = sadd.s32 %s166, 1
    %p170 = scmp.eq.s32.totalorder %s15, 3
    %p171 = scmp.ne.s32.totalorder %s166, %s168
    %p172 = scmp.eq.s32.totalorder %s15, 0
    %p173 = por %p171, %p172
    %p174 = scmp.ne.s32.totalorder %s166, %s168
    %p175 = scmp.eq.s32.totalorder %s20, 3
    %p176 = por %p174, %p175
    %p177 = scmp.ne.s32.totalorder %s168, %s169
    %p178 = scmp.eq.s32.totalorder %s20, 0
    %p179 = por %p177, %p178
    %p180 = scmp.ne.s32.totalorder %s168, %s169
    %p181 = scmp.eq.s32.totalorder %s21, 3
    %p182 = por %p180, %p181
    %p184 = scmp.ne.s32.totalorder %s169, %s183
    %p185 = scmp.eq.s32.totalorder %s21, 0
    %p186 = por %p184, %p185
    %s188 = sadd.s32 %s187, 1
    %p191 = scmp.eq.s32.totalorder %s15, 3
    %p192 = scmp.ne.s32.totalorder %s187, %s189
    %p193 = scmp.eq.s32.totalorder %s15, 0
    %p194 = por %p192, %p193
    %p195 = scmp.ne.s32.totalorder %s187, %s189
    %p196 = scmp.eq.s32.totalorder %s20, 3
    %p197 = por %p195, %p196
    %p198 = scmp.ne.s32.totalorder %s189, %s190
    %p199 = scmp.eq.s32.totalorder %s20, 0
    %p200 = por %p198, %p199
    %p201 = scmp.ne.s32.totalorder %s189, %s190
    %p202 = scmp.eq.s32.totalorder %s21, 3
    %p203 = por %p201, %p202
    %p205 = scmp.ne.s32.totalorder %s190, %s204
    %p206 = scmp.eq.s32.totalorder %s21, 0
    %p207 = por %p205, %p206
    %s209 = sadd.s32 %s208, 1
    %p212 = scmp.eq.s32.totalorder %s15, 3
    %p213 = scmp.ne.s32.totalorder %s208, %s210
    %p214 = scmp.eq.s32.totalorder %s15, 0
    %p215 = por %p213, %p214
    %p216 = scmp.ne.s32.totalorder %s208, %s210
    %p217 = scmp.eq.s32.totalorder %s20, 3
    %p218 = por %p216, %p217
    %p219 = scmp.ne.s32.totalorder %s210, %s211
    %p220 = scmp.eq.s32.totalorder %s20, 0
    %p221 = por %p219, %p220
    %p222 = scmp.ne.s32.totalorder %s210, %s211
    %p223 = scmp.eq.s32.totalorder %s21, 3
    %p224 = por %p222, %p223
    %p226 = scmp.ne.s32.totalorder %s211, %s225
    %p227 = scmp.eq.s32.totalorder %s21, 0
    %p228 = por %p226, %p227
    %s229 = ssub.s32 %s22, %s34
    %s230 = ssub.s32 %s23, %s30
    %s231 = sor.u32 %s229, %s230
    %p232 = scmp.eq.s32.totalorder %s231, 0
    %s234 = sadd.s32 %s233, 1
    %s235 = scalar_select %p232, %s233, %s234
    %p238 = pneg %p232
    %p239 = scmp.eq.s32.totalorder %s15, 3
    %p240 = por %p238, %p239
    %p241 = scmp.ne.s32.totalorder %s233, %s236
    %p242 = scmp.eq.s32.totalorder %s15, 0
    %p243 = por %p241, %p242
    %p244 = scmp.ne.s32.totalorder %s233, %s236
    %p245 = scmp.eq.s32.totalorder %s20, 3
    %p246 = por %p244, %p245
    %p247 = scmp.ne.s32.totalorder %s236, %s237
    %p248 = scmp.eq.s32.totalorder %s20, 0
    %p249 = por %p247, %p248
    %p250 = scmp.ne.s32.totalorder %s236, %s237
    %p251 = scmp.eq.s32.totalorder %s21, 3
    %p252 = por %p250, %p251
    %p254 = scmp.ne.s32.totalorder %s237, %s253
    %p255 = scmp.eq.s32.totalorder %s21, 0
    %p256 = por %p254, %p255
    %p257 = scmp.le.s32.totalorder 1, %s15
    %p258 = scmp.lt.s32.totalorder %s15, 5
    %p259 = pnand %p257, %p258
    %p260 = pneg %p259
    // Predicated region
    $region9: #{tpu_custom_call.1} parent=5 // pred_check
      _
    $region10: #{tpu_custom_call.1} parent=5 // pred_check_branch
      %262 = sbr.rel (%p259) target = $region12
    $region11: #{tpu_custom_call.1} parent=5 // pred_region
      %s263 = ssub.s32 %s15, 1
      // Predicated region
      $region13: #{tpu_custom_call.1} parent=11 // pred_check
        %p264 = pneg %p74
      $region14: #{tpu_custom_call.1} parent=11 // pred_check_branch
        %266 = sbr.rel (%p264) target = $region16
      $region15: #{tpu_custom_call.1} parent=11 // pred_region
        _
      $region16: #{tpu_custom_call.1} parent=11 // pred_fallthru
        _
      // Predicated region
      $region17: #{tpu_custom_call.1} parent=11 // pred_check
        %p267 = pneg %p95
      $region18: #{tpu_custom_call.1} parent=11 // pred_check_branch
        %269 = sbr.rel (%p267) target = $region20
      $region19: #{tpu_custom_call.1} parent=11 // pred_region
        _
      $region20: #{tpu_custom_call.1} parent=11 // pred_fallthru
        _
      // Predicated region
      $region21: #{tpu_custom_call.1} parent=11 // pred_check
        %p270 = pneg %p116
      $region22: #{tpu_custom_call.1} parent=11 // pred_check_branch
        %272 = sbr.rel (%p270) target = $region24
      $region23: #{tpu_custom_call.1} parent=11 // pred_region
        _
      $region24: #{tpu_custom_call.1} parent=11 // pred_fallthru
        _
      // Predicated region
      $region25: #{tpu_custom_call.1} parent=11 // pred_check
        %p273 = pneg %p137
      $region26: #{tpu_custom_call.1} parent=11 // pred_check_branch
        %275 = sbr.rel (%p273) target = $region28
      $region27: #{tpu_custom_call.1} parent=11 // pred_region
        _
      $region28: #{tpu_custom_call.1} parent=11 // pred_fallthru
        _
      // Predicated region
      $region29: #{tpu_custom_call.1} parent=11 // pred_check
        %p276 = pneg %p158
      $region30: #{tpu_custom_call.1} parent=11 // pred_check_branch
        %278 = sbr.rel (%p276) target = $region32
      $region31: #{tpu_custom_call.1} parent=11 // pred_region
        _
      $region32: #{tpu_custom_call.1} parent=11 // pred_fallthru
        _
      // Predicated region
      $region33: #{tpu_custom_call.1} parent=11 // pred_check
        %p279 = pneg %p179
      $region34: #{tpu_custom_call.1} parent=11 // pred_check_branch
        %281 = sbr.rel (%p279) target = $region36
      $region35: #{tpu_custom_call.1} parent=11 // pred_region
        _
      $region36: #{tpu_custom_call.1} parent=11 // pred_fallthru
        _
      // Predicated region
      $region37: #{tpu_custom_call.1} parent=11 // pred_check
        %p282 = pneg %p200
      $region38: #{tpu_custom_call.1} parent=11 // pred_check_branch
        %284 = sbr.rel (%p282) target = $region40
      $region39: #{tpu_custom_call.1} parent=11 // pred_region
        _
      $region40: #{tpu_custom_call.1} parent=11 // pred_fallthru
        _
      // Predicated region
      $region41: #{tpu_custom_call.1} parent=11 // pred_check
        %p285 = pneg %p221
      $region42: #{tpu_custom_call.1} parent=11 // pred_check_branch
        %287 = sbr.rel (%p285) target = $region44
      $region43: #{tpu_custom_call.1} parent=11 // pred_region
        _
      $region44: #{tpu_custom_call.1} parent=11 // pred_fallthru
        _
    $region12: #{tpu_custom_call.1} parent=5 // pred_fallthru
      _
    %p288 = scmp.lt.s32.totalorder %s15, 4
    // Predicated region
    $region45: #{tpu_custom_call.1} parent=5 // pred_check
      %p289 = pneg %p288
    $region46: #{tpu_custom_call.1} parent=5 // pred_check_branch
      %291 = sbr.rel (%p289) target = $region48
    $region47: #{tpu_custom_call.1} parent=5 // pred_region
      // Predicated region
      $region49: #{tpu_custom_call.1} parent=47 // pred_check
        %p292 = pneg %p47
      $region50: #{tpu_custom_call.1} parent=47 // pred_check_branch
        %294 = sbr.rel (%p292) target = $region52
      $region51: #{tpu_custom_call.1} parent=47 // pred_region
        %p295 = scmp.lt.s32.totalorder %s22, 1
        %s296 = scalar_select %p295, %s22, 1
        %s297 = smul.addr %s296, 32
        %s298 = smul.addr %s297, 8
        %s299 = scalar_lea.vmem %s0, %s298
      $region52: #{tpu_custom_call.1} parent=47 // pred_fallthru
        _
    $region48: #{tpu_custom_call.1} parent=5 // pred_fallthru
      _
    %p300 = scmp.le.s32.totalorder 1, %s15
    %p301 = scmp.lt.s32.totalorder %s15, 5
    %p302 = pnand %p300, %p301
    %p303 = pneg %p302
    // Predicated region
    $region53: #{tpu_custom_call.1} parent=5 // pred_check
      _
    $region54: #{tpu_custom_call.1} parent=5 // pred_check_branch
      %305 = sbr.rel (%p302) target = $region56
    $region55: #{tpu_custom_call.1} parent=5 // pred_region
      %s306 = ssub.s32 %s15, 1
      %p307 = scmp.lt.s32.totalorder %s24, 1
      %s308 = scalar_select %p307, %s24, 1
      %s309 = smul.addr %s308, 32
      %s310 = smul.addr %s309, 8
      %s311 = scalar_lea.vmem %s0, %s310
      %p312 = pneg %p53
      %p313 = pneg %p50
      %p314 = pneg %p74
      %p315 = pneg %p71
      %p316 = pneg %p95
      %p317 = pneg %p92
      %p318 = pneg %p116
      %p319 = pneg %p113
      %p320 = pneg %p137
      %p321 = pneg %p134
      %p322 = pneg %p158
      %p323 = pneg %p155
      %p324 = pneg %p179
      %p325 = pneg %p176
      %p326 = pneg %p200
      %p327 = pneg %p197
      %p328 = pneg %p221
      %p329 = pneg %p218
      %p330 = pneg %p249
      %p331 = pneg %p246
      %s332 = smul.u32 8, %s25
      %p333 = scmp.lt.s32.totalorder %s24, 1
      %s334 = scalar_select %p333, %s24, 1
      %p335 = scmp.lt.s32.totalorder %s332, 15
      %s336 = scalar_select %p335, %s332, 15
      %s337 = smul.addr %s336, 2
      %s338 = smul.addr %s334, 32
      %s339 = sadd.s32 %s337, %s338
      %s340 = smul.addr %s339, 8
      %s341 = scalar_lea.vmem %s9, %s340
      %p342 = scmp.lt.s32.totalorder %s24, 1
      %s343 = scalar_select %p342, %s24, 1
      %s344 = smul.addr %s343, 32
      %s345 = smul.addr %s344, 8
      %s346 = scalar_lea.vmem %s0, %s345
      %s347 = smul.u32 8, %s25
      %p348 = scmp.lt.s32.totalorder %s24, 1
      %s349 = scalar_select %p348, %s24, 1
      %p350 = scmp.lt.s32.totalorder %s347, 15
      %s351 = scalar_select %p350, %s347, 15
      %s352 = smul.addr %s351, 2
      %s353 = smul.addr %s349, 32
      %s354 = sadd.s32 %s352, %s353
      %s355 = smul.addr %s354, 8
      %s356 = scalar_lea.vmem %s9, %s355
      %s357 = smul.u32 8, %s25
      %s359 = smul.u32 %s25, 8
      %p360 = scmp.gt.s32.totalorder %s25, 0
      %p361 = scmp.lt.s32.totalorder %s25, 1
      %s362 = ssub.s32 %s359, 1
      %p363 = scmp.gt.s32.totalorder %s362, 0
      %s364 = scalar_select %p363, %s362, 0
      %s365 = sadd.s32 %s359, 8
      %p366 = scmp.lt.s32.totalorder %s365, 15
      %s367 = scalar_select %p366, %s365, 15
      %s368 = smul.u32 %s364, 16
      %s369 = scalar_lea.vmem %s346, %s368
      %v370 = vld [vmem:[%s369] sm:$0xff]
      %v371 = vld [vmem:[%s369 + $0x8] sm:$0xff]
      %s372 = smul.u32 %s359, 16
      %s373 = scalar_lea.vmem %s346, %s372
      %v374 = vld [vmem:[%s373] sm:$0xff]
      %v375 = vld [vmem:[%s373 + $0x8] sm:$0xff]
      %v376 = vld [vmem:[%s373 + $0x10] sm:$0xff]
      %v377 = vld [vmem:[%s373 + $0x18] sm:$0xff]
      %v378 = vld [vmem:[%s373 + $0x20] sm:$0xff]
      %v379 = vld [vmem:[%s373 + $0x28] sm:$0xff]
      %v380 = vld [vmem:[%s373 + $0x30] sm:$0xff]
      %v381 = vld [vmem:[%s373 + $0x38] sm:$0xff]
      %v382 = vld [vmem:[%s373 + $0x40] sm:$0xff]
      %v383 = vld [vmem:[%s373 + $0x48] sm:$0xff]
      %v384 = vld [vmem:[%s373 + $0x50] sm:$0xff]
      %v385 = vld [vmem:[%s373 + $0x58] sm:$0xff]
      %v386 = vld [vmem:[%s373 + $0x60] sm:$0xff]
      %v387 = vld [vmem:[%s373 + $0x68] sm:$0xff]
      %v388 = vld [vmem:[%s373 + $0x70] sm:$0xff]
      %v389 = vld [vmem:[%s373 + $0x78] sm:$0xff]
      %s390 = smul.u32 %s367, 16
      %s391 = scalar_lea.vmem %s346, %s390
      %v392 = vld [vmem:[%s391] sm:$0xff]
      %v393 = vld [vmem:[%s391 + $0x8] sm:$0xff]
      %vm394 = vcmask 31744
      %v395 = vsel %vm394, %v370, 0.0
      %396 = vadd.xlane.f32.xlu0 %v395
      %v397 = vpop.xlane.xlu0 %396
      %v398 = vsel %vm394, %v371, 0.0
      %399 = vadd.xlane.f32.xlu0 %v398
      %v400 = vpop.xlane.xlu0 %399
      %v401 = vsel %vm394, %v374, 0.0
      %402 = vadd.xlane.f32.xlu0 %v401
      %v403 = vpop.xlane.xlu0 %402
      %v404 = vsel %vm394, %v375, 0.0
      %405 = vadd.xlane.f32.xlu0 %v404
      %v406 = vpop.xlane.xlu0 %405
      %v407 = vsel %vm394, %v376, 0.0
      %408 = vadd.xlane.f32.xlu0 %v407
      %v409 = vpop.xlane.xlu0 %408
      %v410 = vsel %vm394, %v377, 0.0
      %411 = vadd.xlane.f32.xlu0 %v410
      %v412 = vpop.xlane.xlu0 %411
      %v413 = vsel %vm394, %v378, 0.0
      %414 = vadd.xlane.f32.xlu0 %v413
      %v415 = vpop.xlane.xlu0 %414
      %v416 = vsel %vm394, %v379, 0.0
      %417 = vadd.xlane.f32.xlu0 %v416
      %v418 = vpop.xlane.xlu0 %417
      %v419 = vsel %vm394, %v380, 0.0
      %420 = vadd.xlane.f32.xlu0 %v419
      %v421 = vpop.xlane.xlu0 %420
      %v422 = vsel %vm394, %v381, 0.0
      %423 = vadd.xlane.f32.xlu0 %v422
      %v424 = vpop.xlane.xlu0 %423
      %v425 = vsel %vm394, %v382, 0.0
      %426 = vadd.xlane.f32.xlu0 %v425
      %v427 = vpop.xlane.xlu0 %426
      %v428 = vsel %vm394, %v383, 0.0
      %429 = vadd.xlane.f32.xlu0 %v428
      %v430 = vpop.xlane.xlu0 %429
      %v431 = vsel %vm394, %v384, 0.0
      %432 = vadd.xlane.f32.xlu0 %v431
      %v433 = vpop.xlane.xlu0 %432
      %v434 = vsel %vm394, %v385, 0.0
      %435 = vadd.xlane.f32.xlu0 %v434
      %v436 = vpop.xlane.xlu0 %435
      %v437 = vsel %vm394, %v386, 0.0
      %438 = vadd.xlane.f32.xlu0 %v437
      %v439 = vpop.xlane.xlu0 %438
      %v440 = vsel %vm394, %v387, 0.0
      %441 = vadd.xlane.f32.xlu0 %v440
      %v442 = vpop.xlane.xlu0 %441
      %v443 = vsel %vm394, %v388, 0.0
      %444 = vadd.xlane.f32.xlu0 %v443
      %v445 = vpop.xlane.xlu0 %444
      %v446 = vsel %vm394, %v389, 0.0
      %447 = vadd.xlane.f32.xlu0 %v446
      %v448 = vpop.xlane.xlu0 %447
      %v449 = vsel %vm394, %v392, 0.0
      %450 = vadd.xlane.f32.xlu0 %v449
      %v451 = vpop.xlane.xlu0 %450
      %v452 = vsel %vm394, %v393, 0.0
      %453 = vadd.xlane.f32.xlu0 %v452
      %v454 = vpop.xlane.xlu0 %453
      %v455 = vrcp.pop 4.0
      %v456 = vmul.f32 %v397, %v455
      %v457 = vmul.f32 %v400, %v455
      %v458 = vmul.f32 %v403, %v455
      %v459 = vmul.f32 %v406, %v455
      %v460 = vmul.f32 %v409, %v455
      %v461 = vmul.f32 %v412, %v455
      %v462 = vmul.f32 %v415, %v455
      %v463 = vmul.f32 %v418, %v455
      %v464 = vmul.f32 %v421, %v455
      %v465 = vmul.f32 %v424, %v455
      %v466 = vmul.f32 %v427, %v455
      %v467 = vmul.f32 %v430, %v455
      %v468 = vmul.f32 %v433, %v455
      %v469 = vmul.f32 %v436, %v455
      %v470 = vmul.f32 %v439, %v455
      %v471 = vmul.f32 %v442, %v455
      %v472 = vmul.f32 %v445, %v455
      %v473 = vmul.f32 %v448, %v455
      %v474 = vmul.f32 %v451, %v455
      %v475 = vmul.f32 %v454, %v455
      %v476 = vsub.f32 %v370, %v456
      %v477 = vsub.f32 %v371, %v457
      %v478 = vsub.f32 %v374, %v458
      %v479 = vsub.f32 %v375, %v459
      %v480 = vsub.f32 %v376, %v460
      %v481 = vsub.f32 %v377, %v461
      %v482 = vsub.f32 %v378, %v462
      %v483 = vsub.f32 %v379, %v463
      %v484 = vsub.f32 %v380, %v464
      %v485 = vsub.f32 %v381, %v465
      %v486 = vsub.f32 %v382, %v466
      %v487 = vsub.f32 %v383, %v467
      %v488 = vsub.f32 %v384, %v468
      %v489 = vsub.f32 %v385, %v469
      %v490 = vsub.f32 %v386, %v470
      %v491 = vsub.f32 %v387, %v471
      %v492 = vsub.f32 %v388, %v472
      %v493 = vsub.f32 %v389, %v473
      %v494 = vsub.f32 %v392, %v474
      %v495 = vsub.f32 %v393, %v475
      %v496 = vmul.f32 %v476, %v476
      %v497 = vmul.f32 %v477, %v477
      %v498 = vmul.f32 %v478, %v478
      %v499 = vmul.f32 %v479, %v479
      %v500 = vmul.f32 %v480, %v480
      %v501 = vmul.f32 %v481, %v481
      %v502 = vmul.f32 %v482, %v482
      %v503 = vmul.f32 %v483, %v483
      %v504 = vmul.f32 %v484, %v484
      %v505 = vmul.f32 %v485, %v485
      %v506 = vmul.f32 %v486, %v486
      %v507 = vmul.f32 %v487, %v487
      %v508 = vmul.f32 %v488, %v488
      %v509 = vmul.f32 %v489, %v489
      %v510 = vmul.f32 %v490, %v490
      %v511 = vmul.f32 %v491, %v491
      %v512 = vmul.f32 %v492, %v492
      %v513 = vmul.f32 %v493, %v493
      %v514 = vmul.f32 %v494, %v494
      %v515 = vmul.f32 %v495, %v495
      %v516 = vsel %vm394, %v496, 0.0
      %517 = vadd.xlane.f32.xlu0 %v516
      %v518 = vpop.xlane.xlu0 %517
      %v519 = vsel %vm394, %v497, 0.0
      %520 = vadd.xlane.f32.xlu0 %v519
      %v521 = vpop.xlane.xlu0 %520
      %v522 = vsel %vm394, %v498, 0.0
      %523 = vadd.xlane.f32.xlu0 %v522
      %v524 = vpop.xlane.xlu0 %523
      %v525 = vsel %vm394, %v499, 0.0
      %526 = vadd.xlane.f32.xlu0 %v525
      %v527 = vpop.xlane.xlu0 %526
      %v528 = vsel %vm394, %v500, 0.0
      %529 = vadd.xlane.f32.xlu0 %v528
      %v530 = vpop.xlane.xlu0 %529
      %v531 = vsel %vm394, %v501, 0.0
      %532 = vadd.xlane.f32.xlu0 %v531
      %v533 = vpop.xlane.xlu0 %532
      %v534 = vsel %vm394, %v502, 0.0
      %535 = vadd.xlane.f32.xlu0 %v534
      %v536 = vpop.xlane.xlu0 %535
      %v537 = vsel %vm394, %v503, 0.0
      %538 = vadd.xlane.f32.xlu0 %v537
      %v539 = vpop.xlane.xlu0 %538
      %v540 = vsel %vm394, %v504, 0.0
      %541 = vadd.xlane.f32.xlu0 %v540
      %v542 = vpop.xlane.xlu0 %541
      %v543 = vsel %vm394, %v505, 0.0
      %544 = vadd.xlane.f32.xlu0 %v543
      %v545 = vpop.xlane.xlu0 %544
      %v546 = vsel %vm394, %v506, 0.0
      %547 = vadd.xlane.f32.xlu0 %v546
      %v548 = vpop.xlane.xlu0 %547
      %v549 = vsel %vm394, %v507, 0.0
      %550 = vadd.xlane.f32.xlu0 %v549
      %v551 = vpop.xlane.xlu0 %550
      %v552 = vsel %vm394, %v508, 0.0
      %553 = vadd.xlane.f32.xlu0 %v552
      %v554 = vpop.xlane.xlu0 %553
      %v555 = vsel %vm394, %v509, 0.0
      %556 = vadd.xlane.f32.xlu0 %v555
      %v557 = vpop.xlane.xlu0 %556
      %v558 = vsel %vm394, %v510, 0.0
      %559 = vadd.xlane.f32.xlu0 %v558
      %v560 = vpop.xlane.xlu0 %559
      %v561 = vsel %vm394, %v511, 0.0
      %562 = vadd.xlane.f32.xlu0 %v561
      %v563 = vpop.xlane.xlu0 %562
      %v564 = vsel %vm394, %v512, 0.0
      %565 = vadd.xlane.f32.xlu0 %v564
      %v566 = vpop.xlane.xlu0 %565
      %v567 = vsel %vm394, %v513, 0.0
      %568 = vadd.xlane.f32.xlu0 %v567
      %v569 = vpop.xlane.xlu0 %568
      %v570 = vsel %vm394, %v514, 0.0
      %571 = vadd.xlane.f32.xlu0 %v570
      %v572 = vpop.xlane.xlu0 %571
      %v573 = vsel %vm394, %v515, 0.0
      %574 = vadd.xlane.f32.xlu0 %v573
      %v575 = vpop.xlane.xlu0 %574
      %v576 = vmul.f32 %v518, %v455
      %v577 = vmul.f32 %v521, %v455
      %v578 = vmul.f32 %v524, %v455
      %v579 = vmul.f32 %v527, %v455
      %v580 = vmul.f32 %v530, %v455
      %v581 = vmul.f32 %v533, %v455
      %v582 = vmul.f32 %v536, %v455
      %v583 = vmul.f32 %v539, %v455
      %v584 = vmul.f32 %v542, %v455
      %v585 = vmul.f32 %v545, %v455
      %v586 = vmul.f32 %v548, %v455
      %v587 = vmul.f32 %v551, %v455
      %v588 = vmul.f32 %v554, %v455
      %v589 = vmul.f32 %v557, %v455
      %v590 = vmul.f32 %v560, %v455
      %v591 = vmul.f32 %v563, %v455
      %v592 = vmul.f32 %v566, %v455
      %v593 = vmul.f32 %v569, %v455
      %v594 = vmul.f32 %v572, %v455
      %v595 = vmul.f32 %v575, %v455
      %v596 = vadd.f32 %v576, 1e-06
      %v597 = vadd.f32 %v577, 1e-06
      %v598 = vadd.f32 %v578, 1e-06
      %v599 = vadd.f32 %v579, 1e-06
      %v600 = vadd.f32 %v580, 1e-06
      %v601 = vadd.f32 %v581, 1e-06
      %v602 = vadd.f32 %v582, 1e-06
      %v603 = vadd.f32 %v583, 1e-06
      %v604 = vadd.f32 %v584, 1e-06
      %v605 = vadd.f32 %v585, 1e-06
      %v606 = vadd.f32 %v586, 1e-06
      %v607 = vadd.f32 %v587, 1e-06
      %v608 = vadd.f32 %v588, 1e-06
      %v609 = vadd.f32 %v589, 1e-06
      %v610 = vadd.f32 %v590, 1e-06
      %v611 = vadd.f32 %v591, 1e-06
      %v612 = vadd.f32 %v592, 1e-06
      %v613 = vadd.f32 %v593, 1e-06
      %v614 = vadd.f32 %v594, 1e-06
      %v615 = vadd.f32 %v595, 1e-06
      %v616 = vrsqrt.pop %v596
      %v617 = vrsqrt.pop %v597
      %v618 = vrsqrt.pop %v598
      %v619 = vrsqrt.pop %v599
      %v620 = vrsqrt.pop %v600
      %v621 = vrsqrt.pop %v601
      %v622 = vrsqrt.pop %v602
      %v623 = vrsqrt.pop %v603
      %v624 = vrsqrt.pop %v604
      %v625 = vrsqrt.pop %v605
      %v626 = vrsqrt.pop %v606
      %v627 = vrsqrt.pop %v607
      %v628 = vrsqrt.pop %v608
      %v629 = vrsqrt.pop %v609
      %v630 = vrsqrt.pop %v610
      %v631 = vrsqrt.pop %v611
      %v632 = vrsqrt.pop %v612
      %v633 = vrsqrt.pop %v613
      %v634 = vrsqrt.pop %v614
      %v635 = vrsqrt.pop %v615
      %v636 = vmul.f32 %v476, %v616
      %v637 = vmul.f32 %v477, %v617
      %v638 = vmul.f32 %v478, %v618
      %v639 = vmul.f32 %v479, %v619
      %v640 = vmul.f32 %v480, %v620
      %v641 = vmul.f32 %v481, %v621
      %v642 = vmul.f32 %v482, %v622
      %v643 = vmul.f32 %v483, %v623
      %v644 = vmul.f32 %v484, %v624
      %v645 = vmul.f32 %v485, %v625
      %v646 = vmul.f32 %v486, %v626
      %v647 = vmul.f32 %v487, %v627
      %v648 = vmul.f32 %v488, %v628
      %v649 = vmul.f32 %v489, %v629
      %v650 = vmul.f32 %v490, %v630
      %v651 = vmul.f32 %v491, %v631
      %v652 = vmul.f32 %v492, %v632
      %v653 = vmul.f32 %v493, %v633
      %v654 = vmul.f32 %v494, %v634
      %v655 = vmul.f32 %v495, %v635
      %v656 = vld [vmem:[%s1] sm:$0x1]
      %v658 = vlaneseq
      %v659 = vshrl.u32 %v658, 7
      %v660 = vsub.s32 0, %v659
      %v661 = vrot.slane %v656, %v660
      %v663 = vmul.f32 %v636, %v661
      %v664 = vmul.f32 %v637, %v661
      %v665 = vmul.f32 %v638, %v661
      %v666 = vmul.f32 %v639, %v661
      %v667 = vmul.f32 %v640, %v661
      %v668 = vmul.f32 %v641, %v661
      %v669 = vmul.f32 %v642, %v661
      %v670 = vmul.f32 %v643, %v661
      %v671 = vmul.f32 %v644, %v661
      %v672 = vmul.f32 %v645, %v661
      %v673 = vmul.f32 %v646, %v661
      %v674 = vmul.f32 %v647, %v661
      %v675 = vmul.f32 %v648, %v661
      %v676 = vmul.f32 %v649, %v661
      %v677 = vmul.f32 %v650, %v661
      %v678 = vmul.f32 %v651, %v661
      %v679 = vmul.f32 %v652, %v661
      %v680 = vmul.f32 %v653, %v661
      %v681 = vmul.f32 %v654, %v661
      %v682 = vmul.f32 %v655, %v661
      %v683 = vld [vmem:[%s2] sm:$0x1]
      %v685 = vlaneseq
      %v686 = vshrl.u32 %v685, 7
      %v687 = vsub.s32 0, %v686
      %v688 = vrot.slane %v683, %v687
      %v690 = vadd.f32 %v663, %v688
      %v691 = vadd.f32 %v664, %v688
      %v692 = vadd.f32 %v665, %v688
      %v693 = vadd.f32 %v666, %v688
      %v694 = vadd.f32 %v667, %v688
      %v695 = vadd.f32 %v668, %v688
      %v696 = vadd.f32 %v669, %v688
      %v697 = vadd.f32 %v670, %v688
      %v698 = vadd.f32 %v671, %v688
      %v699 = vadd.f32 %v672, %v688
      %v700 = vadd.f32 %v673, %v688
      %v701 = vadd.f32 %v674, %v688
      %v702 = vadd.f32 %v675, %v688
      %v703 = vadd.f32 %v676, %v688
      %v704 = vadd.f32 %v677, %v688
      %v705 = vadd.f32 %v678, %v688
      %v706 = vadd.f32 %v679, %v688
      %v707 = vadd.f32 %v680, %v688
      %v708 = vadd.f32 %v681, %v688
      %v709 = vadd.f32 %v682, %v688
      %v710 = vpack.c.bf16 %v691, %v690
      %v711 = vpack.c.bf16 %v693, %v692
      %v712 = vpack.c.bf16 %v695, %v694
      %v713 = vpack.c.bf16 %v697, %v696
      %v714 = vpack.c.bf16 %v699, %v698
      %v715 = vpack.c.bf16 %v701, %v700
      %v716 = vpack.c.bf16 %v703, %v702
      %v717 = vpack.c.bf16 %v705, %v704
      %v718 = vpack.c.bf16 %v707, %v706
      %v719 = vpack.c.bf16 %v709, %v708
      %v720 = vld [vmem:[%s3] sm:$0x3]
      %v721 = vld [vmem:[%s4] sm:$0x1]
      %v723 = vlaneseq
      %v724 = vshrl.u32 %v723, 7
      %v725 = vsub.s32 0, %v724
      %v726 = vrot.slane %v721, %v725
      %v729 = vsel %vm394, %v710, 0
      %v732 = vsel %vm394, %v711, 0
      %v735 = vsel %vm394, %v712, 0
      %v738 = vsel %vm394, %v713, 0
      %v741 = vsel %vm394, %v714, 0
      %v744 = vsel %vm394, %v715, 0
      %v747 = vsel %vm394, %v716, 0
      %v750 = vsel %vm394, %v717, 0
      %v753 = vsel %vm394, %v718, 0
      %v756 = vsel %vm394, %v719, 0
      %vm758 = vcmask 1041408
      %v760 = vsel %vm758, %v720, 0
      %762 = vmatprep.subr.bf16.mxu0 0
      %763 = vmatpush1.bf16.msra.mxu0 %v760
      %764 = vmatprep.subr.bf16.mxu0 0
      %765 = vmatpush1.bf16.msra.mxu0 0
      %766 = vmatprep.subr.bf16.mxu0 0
      %767 = vmatpush1.bf16.msra.mxu0 0
      %768 = vmatprep.subr.bf16.mxu0 0
      %769 = vmatpush1.bf16.msra.mxu0 0
      %770 = vmatprep.subr.bf16.mxu0 0
      %771 = vmatpush1.bf16.msra.mxu0 0
      %772 = vmatprep.subr.bf16.mxu0 0
      %773 = vmatpush1.bf16.msra.mxu0 0
      %774 = vmatprep.subr.bf16.mxu0 0
      %775 = vmatpush1.bf16.msra.mxu0 0
      %776 = vmatprep.subr.bf16.mxu0 0
      %777 = vmatpush1.bf16.msra.mxu0 0
      %778 = vmatprep.subr.bf16.mxu0 0
      %779 = vmatpush1.bf16.msra.mxu0 0
      %780 = vmatprep.subr.bf16.mxu0 0
      %781 = vmatpush1.bf16.msra.mxu0 0
      %782 = vmatprep.subr.bf16.mxu0 0
      %783 = vmatpush1.bf16.msra.mxu0 0
      %784 = vmatprep.subr.bf16.mxu0 0
      %785 = vmatpush1.bf16.msra.mxu0 0
      %786 = vmatprep.subr.bf16.mxu0 0
      %787 = vmatpush1.bf16.msra.mxu0 0
      %788 = vmatprep.subr.bf16.mxu0 0
      %789 = vmatpush1.bf16.msra.mxu0 0
      %790 = vmatprep.subr.bf16.mxu0 0
      %791 = vmatpush1.bf16.msra.mxu0 0
      %792 = vmatprep.subr.bf16.mxu0 0
      %793 = vmatpush1.bf16.msra.mxu0 0
      %794 = vmatprep.mubr.bf16.mxu0 0
      %795 = vmatmul.mubr.bf16.gmra.mrb[0].mxu0 %v729
      %v796 = vpop.f32.mrb[0].mxu0
      %v797 = vadd.f32 %v726, %v796
      %v798 = vpop.f32.mrb[0].mxu0
      %v799 = vpop.f32.mrb[0].mxu0
      %v800 = vadd.f32 %v726, %v799
      %v801 = vpop.f32.mrb[0].mxu0
      %802 = vmatprep.mubr.bf16.mxu0 0
      %803 = vmatmul.mubr.bf16.gmra.mrb[0].mxu0 %v732
      %v804 = vpop.f32.mrb[0].mxu0
      %v805 = vadd.f32 %v726, %v804
      %v806 = vpop.f32.mrb[0].mxu0
      %v807 = vpop.f32.mrb[0].mxu0
      %v808 = vadd.f32 %v726, %v807
      %v809 = vpop.f32.mrb[0].mxu0
      %810 = vmatprep.mubr.bf16.mxu0 0
      %811 = vmatmul.mubr.bf16.gmra.mrb[0].mxu0 %v735
      %v812 = vpop.f32.mrb[0].mxu0
      %v813 = vadd.f32 %v726, %v812
      %v814 = vpop.f32.mrb[0].mxu0
      %v815 = vpop.f32.mrb[0].mxu0
      %v816 = vadd.f32 %v726, %v815
      %v817 = vpop.f32.mrb[0].mxu0
      %818 = vmatprep.mubr.bf16.mxu0 0
      %819 = vmatmul.mubr.bf16.gmra.mrb[0].mxu0 %v738
      %v820 = vpop.f32.mrb[0].mxu0
      %v821 = vadd.f32 %v726, %v820
      %v822 = vpop.f32.mrb[0].mxu0
      %v823 = vpop.f32.mrb[0].mxu0
      %v824 = vadd.f32 %v726, %v823
      %v825 = vpop.f32.mrb[0].mxu0
      %826 = vmatprep.mubr.bf16.mxu0 0
      %827 = vmatmul.mubr.bf16.gmra.mrb[0].mxu0 %v741
      %v828 = vpop.f32.mrb[0].mxu0
      %v829 = vadd.f32 %v726, %v828
      %v830 = vpop.f32.mrb[0].mxu0
      %v831 = vpop.f32.mrb[0].mxu0
      %v832 = vadd.f32 %v726, %v831
      %v833 = vpop.f32.mrb[0].mxu0
      %834 = vmatprep.mubr.bf16.mxu0 0
      %835 = vmatmul.mubr.bf16.gmra.mrb[0].mxu0 %v744
      %v836 = vpop.f32.mrb[0].mxu0
      %v837 = vadd.f32 %v726, %v836
      %v838 = vpop.f32.mrb[0].mxu0
      %v839 = vpop.f32.mrb[0].mxu0
      %v840 = vadd.f32 %v726, %v839
      %v841 = vpop.f32.mrb[0].mxu0
      %842 = vmatprep.mubr.bf16.mxu0 0
      %843 = vmatmul.mubr.bf16.gmra.mrb[0].mxu0 %v747
      %v844 = vpop.f32.mrb[0].mxu0
      %v845 = vadd.f32 %v726, %v844
      %v846 = vpop.f32.mrb[0].mxu0
      %v847 = vpop.f32.mrb[0].mxu0
      %v848 = vadd.f32 %v726, %v847
      %v849 = vpop.f32.mrb[0].mxu0
      %850 = vmatprep.mubr.bf16.mxu0 0
      %851 = vmatmul.mubr.bf16.gmra.mrb[0].mxu0 %v750
      %v852 = vpop.f32.mrb[0].mxu0
      %v853 = vadd.f32 %v726, %v852
      %v854 = vpop.f32.mrb[0].mxu0
      %v855 = vpop.f32.mrb[0].mxu0
      %v856 = vadd.f32 %v726, %v855
      %v857 = vpop.f32.mrb[0].mxu0
      %858 = vmatprep.mubr.bf16.mxu0 0
      %859 = vmatmul.mubr.bf16.gmra.mrb[0].mxu0 %v753
      %v860 = vpop.f32.mrb[0].mxu0
      %v861 = vadd.f32 %v726, %v860
      %v862 = vpop.f32.mrb[0].mxu0
      %v863 = vpop.f32.mrb[0].mxu0
      %v864 = vadd.f32 %v726, %v863
      %v865 = vpop.f32.mrb[0].mxu0
      %866 = vmatprep.mubr.bf16.mxu0 0
      %867 = vmatmul.mubr.bf16.gmra.mrb[0].mxu0 %v756
      %v868 = vpop.f32.mrb[0].mxu0
      %v869 = vadd.f32 %v726, %v868
      %v870 = vpop.f32.mrb[0].mxu0
      %v871 = vpop.f32.mrb[0].mxu0
      %v872 = vadd.f32 %v726, %v871
      %v873 = vpop.f32.mrb[0].mxu0
      %874 = vdwg.mxu0
      %v875 = vmul.f32 %v797, 0.5
      %v876 = vmul.f32 %v800, 0.5
      %v877 = vmul.f32 %v805, 0.5
      %v878 = vmul.f32 %v808, 0.5
      %v879 = vmul.f32 %v813, 0.5
      %v880 = vmul.f32 %v816, 0.5
      %v881 = vmul.f32 %v821, 0.5
      %v882 = vmul.f32 %v824, 0.5
      %v883 = vmul.f32 %v829, 0.5
      %v884 = vmul.f32 %v832, 0.5
      %v885 = vmul.f32 %v837, 0.5
      %v886 = vmul.f32 %v840, 0.5
      %v887 = vmul.f32 %v845, 0.5
      %v888 = vmul.f32 %v848, 0.5
      %v889 = vmul.f32 %v853, 0.5
      %v890 = vmul.f32 %v856, 0.5
      %v891 = vmul.f32 %v861, 0.5
      %v892 = vmul.f32 %v864, 0.5
      %v893 = vmul.f32 %v869, 0.5
      %v894 = vmul.f32 %v872, 0.5
      %v895 = vmul.f32 %v797, 0.70710677
      %v896 = vmul.f32 %v800, 0.70710677
      %v897 = vmul.f32 %v805, 0.70710677
      %v898 = vmul.f32 %v808, 0.70710677
      %v899 = vmul.f32 %v813, 0.70710677
      %v900 = vmul.f32 %v816, 0.70710677
      %v901 = vmul.f32 %v821, 0.70710677
      %v902 = vmul.f32 %v824, 0.70710677
      %v903 = vmul.f32 %v829, 0.70710677
      %v904 = vmul.f32 %v832, 0.70710677
      %v905 = vmul.f32 %v837, 0.70710677
      %v906 = vmul.f32 %v840, 0.70710677
      %v907 = vmul.f32 %v845, 0.70710677
      %v908 = vmul.f32 %v848, 0.70710677
      %v909 = vmul.f32 %v853, 0.70710677
      %v910 = vmul.f32 %v856, 0.70710677
      %v911 = vmul.f32 %v861, 0.70710677
      %v912 = vmul.f32 %v864, 0.70710677
      %v913 = vmul.f32 %v869, 0.70710677
      %v914 = vmul.f32 %v872, 0.70710677
      %vm915 = vcmp.ge.f32.partialorder %v895, 0.0
      %vm916 = vcmp.ge.f32.partialorder %v896, 0.0
      %vm917 = vcmp.ge.f32.partialorder %v897, 0.0
      %vm918 = vcmp.ge.f32.partialorder %v898, 0.0
      %vm919 = vcmp.ge.f32.partialorder %v899, 0.0
      %vm920 = vcmp.ge.f32.partialorder %v900, 0.0
      %vm921 = vcmp.ge.f32.partialorder %v901, 0.0
      %vm922 = vcmp.ge.f32.partialorder %v902, 0.0
      %vm923 = vcmp.ge.f32.partialorder %v903, 0.0
      %vm924 = vcmp.ge.f32.partialorder %v904, 0.0
      %vm925 = vcmp.ge.f32.partialorder %v905, 0.0
      %vm926 = vcmp.ge.f32.partialorder %v906, 0.0
      %vm927 = vcmp.ge.f32.partialorder %v907, 0.0
      %vm928 = vcmp.ge.f32.partialorder %v908, 0.0
      %vm929 = vcmp.ge.f32.partialorder %v909, 0.0
      %vm930 = vcmp.ge.f32.partialorder %v910, 0.0
      %vm931 = vcmp.ge.f32.partialorder %v911, 0.0
      %vm932 = vcmp.ge.f32.partialorder %v912, 0.0
      %vm933 = vcmp.ge.f32.partialorder %v913, 0.0
      %vm934 = vcmp.ge.f32.partialorder %v914, 0.0
      %v935 = vsel %vm915, 1.0, -1.0
      %v936 = vsel %vm916, 1.0, -1.0
      %v937 = vsel %vm917, 1.0, -1.0
      %v938 = vsel %vm918, 1.0, -1.0
      %v939 = vsel %vm919, 1.0, -1.0
      %v940 = vsel %vm920, 1.0, -1.0
      %v941 = vsel %vm921, 1.0, -1.0
      %v942 = vsel %vm922, 1.0, -1.0
      %v943 = vsel %vm923, 1.0, -1.0
      %v944 = vsel %vm924, 1.0, -1.0
      %v945 = vsel %vm925, 1.0, -1.0
      %v946 = vsel %vm926, 1.0, -1.0
      %v947 = vsel %vm927, 1.0, -1.0
      %v948 = vsel %vm928, 1.0, -1.0
      %v949 = vsel %vm929, 1.0, -1.0
      %v950 = vsel %vm930, 1.0, -1.0
      %v951 = vsel %vm931, 1.0, -1.0
      %v952 = vsel %vm932, 1.0, -1.0
      %v953 = vsel %vm933, 1.0, -1.0
      %v954 = vsel %vm934, 1.0, -1.0
      %v955 = vand.u32 2147483647, %v895
      %v956 = vand.u32 2147483647, %v896
      %v957 = vand.u32 2147483647, %v897
      %v958 = vand.u32 2147483647, %v898
      %v959 = vand.u32 2147483647, %v899
      %v960 = vand.u32 2147483647, %v900
      %v961 = vand.u32 2147483647, %v901
      %v962 = vand.u32 2147483647, %v902
      %v963 = vand.u32 2147483647, %v903
      %v964 = vand.u32 2147483647, %v904
      %v965 = vand.u32 2147483647, %v905
      %v966 = vand.u32 2147483647, %v906
      %v967 = vand.u32 2147483647, %v907
      %v968 = vand.u32 2147483647, %v908
      %v969 = vand.u32 2147483647, %v909
      %v970 = vand.u32 2147483647, %v910
      %v971 = vand.u32 2147483647, %v911
      %v972 = vand.u32 2147483647, %v912
      %v973 = vand.u32 2147483647, %v913
      %v974 = vand.u32 2147483647, %v914
      %v975 = vmul.f32 %v955, 0.3275911
      %v976 = vmul.f32 %v956, 0.3275911
      %v977 = vmul.f32 %v957, 0.3275911
      %v978 = vmul.f32 %v958, 0.3275911
      %v979 = vmul.f32 %v959, 0.3275911
      %v980 = vmul.f32 %v960, 0.3275911
      %v981 = vmul.f32 %v961, 0.3275911
      %v982 = vmul.f32 %v962, 0.3275911
      %v983 = vmul.f32 %v963, 0.3275911
      %v984 = vmul.f32 %v964, 0.3275911
      %v985 = vmul.f32 %v965, 0.3275911
      %v986 = vmul.f32 %v966, 0.3275911
      %v987 = vmul.f32 %v967, 0.3275911
      %v988 = vmul.f32 %v968, 0.3275911
      %v989 = vmul.f32 %v969, 0.3275911
      %v990 = vmul.f32 %v970, 0.3275911
      %v991 = vmul.f32 %v971, 0.3275911
      %v992 = vmul.f32 %v972, 0.3275911
      %v993 = vmul.f32 %v973, 0.3275911
      %v994 = vmul.f32 %v974, 0.3275911
      %v995 = vadd.f32 %v975, 1.0
      %v996 = vadd.f32 %v976, 1.0
      %v997 = vadd.f32 %v977, 1.0
      %v998 = vadd.f32 %v978, 1.0
      %v999 = vadd.f32 %v979, 1.0
      %v1000 = vadd.f32 %v980, 1.0
      %v1001 = vadd.f32 %v981, 1.0
      %v1002 = vadd.f32 %v982, 1.0
      %v1003 = vadd.f32 %v983, 1.0
      %v1004 = vadd.f32 %v984, 1.0
      %v1005 = vadd.f32 %v985, 1.0
      %v1006 = vadd.f32 %v986, 1.0
      %v1007 = vadd.f32 %v987, 1.0
      %v1008 = vadd.f32 %v988, 1.0
      %v1009 = vadd.f32 %v989, 1.0
      %v1010 = vadd.f32 %v990, 1.0
      %v1011 = vadd.f32 %v991, 1.0
      %v1012 = vadd.f32 %v992, 1.0
      %v1013 = vadd.f32 %v993, 1.0
      %v1014 = vadd.f32 %v994, 1.0
      %v1015 = vrcp.pop %v995
      %v1016 = vrcp.pop %v996
      %v1017 = vrcp.pop %v997
      %v1018 = vrcp.pop %v998
      %v1019 = vrcp.pop %v999
      %v1020 = vrcp.pop %v1000
      %v1021 = vrcp.pop %v1001
      %v1022 = vrcp.pop %v1002
      %v1023 = vrcp.pop %v1003
      %v1024 = vrcp.pop %v1004
      %v1025 = vrcp.pop %v1005
      %v1026 = vrcp.pop %v1006
      %v1027 = vrcp.pop %v1007
      %v1028 = vrcp.pop %v1008
      %v1029 = vrcp.pop %v1009
      %v1030 = vrcp.pop %v1010
      %v1031 = vrcp.pop %v1011
      %v1032 = vrcp.pop %v1012
      %v1033 = vrcp.pop %v1013
      %v1034 = vrcp.pop %v1014
      %v1035 = vmul.f32 %v1015, 1.0614054
      %v1036 = vmul.f32 %v1016, 1.0614054
      %v1037 = vmul.f32 %v1017, 1.0614054
      %v1038 = vmul.f32 %v1018, 1.0614054
      %v1039 = vmul.f32 %v1019, 1.0614054
      %v1040 = vmul.f32 %v1020, 1.0614054
      %v1041 = vmul.f32 %v1021, 1.0614054
      %v1042 = vmul.f32 %v1022, 1.0614054
      %v1043 = vmul.f32 %v1023, 1.0614054
      %v1044 = vmul.f32 %v1024, 1.0614054
      %v1045 = vmul.f32 %v1025, 1.0614054
      %v1046 = vmul.f32 %v1026, 1.0614054
      %v1047 = vmul.f32 %v1027, 1.0614054
      %v1048 = vmul.f32 %v1028, 1.0614054
      %v1049 = vmul.f32 %v1029, 1.0614054
      %v1050 = vmul.f32 %v1030, 1.0614054
      %v1051 = vmul.f32 %v1031, 1.0614054
      %v1052 = vmul.f32 %v1032, 1.0614054
      %v1053 = vmul.f32 %v1033, 1.0614054
      %v1054 = vmul.f32 %v1034, 1.0614054
      %v1055 = vadd.f32 %v1035, -1.4531521
      %v1056 = vadd.f32 %v1036, -1.4531521
      %v1057 = vadd.f32 %v1037, -1.4531521
      %v1058 = vadd.f32 %v1038, -1.4531521
      %v1059 = vadd.f32 %v1039, -1.4531521
      %v1060 = vadd.f32 %v1040, -1.4531521
      %v1061 = vadd.f32 %v1041, -1.4531521
      %v1062 = vadd.f32 %v1042, -1.4531521
      %v1063 = vadd.f32 %v1043, -1.4531521
      %v1064 = vadd.f32 %v1044, -1.4531521
      %v1065 = vadd.f32 %v1045, -1.4531521
      %v1066 = vadd.f32 %v1046, -1.4531521
      %v1067 = vadd.f32 %v1047, -1.4531521
      %v1068 = vadd.f32 %v1048, -1.4531521
      %v1069 = vadd.f32 %v1049, -1.4531521
      %v1070 = vadd.f32 %v1050, -1.4531521
      %v1071 = vadd.f32 %v1051, -1.4531521
      %v1072 = vadd.f32 %v1052, -1.4531521
      %v1073 = vadd.f32 %v1053, -1.4531521
      %v1074 = vadd.f32 %v1054, -1.4531521
      %v1075 = vmul.f32 %v1055, %v1015
      %v1076 = vmul.f32 %v1056, %v1016
      %v1077 = vmul.f32 %v1057, %v1017
      %v1078 = vmul.f32 %v1058, %v1018
      %v1079 = vmul.f32 %v1059, %v1019
      %v1080 = vmul.f32 %v1060, %v1020
      %v1081 = vmul.f32 %v1061, %v1021
      %v1082 = vmul.f32 %v1062, %v1022
      %v1083 = vmul.f32 %v1063, %v1023
      %v1084 = vmul.f32 %v1064, %v1024
      %v1085 = vmul.f32 %v1065, %v1025
      %v1086 = vmul.f32 %v1066, %v1026
      %v1087 = vmul.f32 %v1067, %v1027
      %v1088 = vmul.f32 %v1068, %v1028
      %v1089 = vmul.f32 %v1069, %v1029
      %v1090 = vmul.f32 %v1070, %v1030
      %v1091 = vmul.f32 %v1071, %v1031
      %v1092 = vmul.f32 %v1072, %v1032
      %v1093 = vmul.f32 %v1073, %v1033
      %v1094 = vmul.f32 %v1074, %v1034
      %v1095 = vadd.f32 %v1075, 1.4214138
      %v1096 = vadd.f32 %v1076, 1.4214138
      %v1097 = vadd.f32 %v1077, 1.4214138
      %v1098 = vadd.f32 %v1078, 1.4214138
      %v1099 = vadd.f32 %v1079, 1.4214138
      %v1100 = vadd.f32 %v1080, 1.4214138
      %v1101 = vadd.f32 %v1081, 1.4214138
      %v1102 = vadd.f32 %v1082, 1.4214138
      %v1103 = vadd.f32 %v1083, 1.4214138
      %v1104 = vadd.f32 %v1084, 1.4214138
      %v1105 = vadd.f32 %v1085, 1.4214138
      %v1106 = vadd.f32 %v1086, 1.4214138
      %v1107 = vadd.f32 %v1087, 1.4214138
      %v1108 = vadd.f32 %v1088, 1.4214138
      %v1109 = vadd.f32 %v1089, 1.4214138
      %v1110 = vadd.f32 %v1090, 1.4214138
      %v1111 = vadd.f32 %v1091, 1.4214138
      %v1112 = vadd.f32 %v1092, 1.4214138
      %v1113 = vadd.f32 %v1093, 1.4214138
      %v1114 = vadd.f32 %v1094, 1.4214138
      %v1115 = vmul.f32 %v1095, %v1015
      %v1116 = vmul.f32 %v1096, %v1016
      %v1117 = vmul.f32 %v1097, %v1017
      %v1118 = vmul.f32 %v1098, %v1018
      %v1119 = vmul.f32 %v1099, %v1019
      %v1120 = vmul.f32 %v1100, %v1020
      %v1121 = vmul.f32 %v1101, %v1021
      %v1122 = vmul.f32 %v1102, %v1022
      %v1123 = vmul.f32 %v1103, %v1023
      %v1124 = vmul.f32 %v1104, %v1024
      %v1125 = vmul.f32 %v1105, %v1025
      %v1126 = vmul.f32 %v1106, %v1026
      %v1127 = vmul.f32 %v1107, %v1027
      %v1128 = vmul.f32 %v1108, %v1028
      %v1129 = vmul.f32 %v1109, %v1029
      %v1130 = vmul.f32 %v1110, %v1030
      %v1131 = vmul.f32 %v1111, %v1031
      %v1132 = vmul.f32 %v1112, %v1032
      %v1133 = vmul.f32 %v1113, %v1033
      %v1134 = vmul.f32 %v1114, %v1034
      %v1135 = vadd.f32 %v1115, -0.28449672
      %v1136 = vadd.f32 %v1116, -0.28449672
      %v1137 = vadd.f32 %v1117, -0.28449672
      %v1138 = vadd.f32 %v1118, -0.28449672
      %v1139 = vadd.f32 %v1119, -0.28449672
      %v1140 = vadd.f32 %v1120, -0.28449672
      %v1141 = vadd.f32 %v1121, -0.28449672
      %v1142 = vadd.f32 %v1122, -0.28449672
      %v1143 = vadd.f32 %v1123, -0.28449672
      %v1144 = vadd.f32 %v1124, -0.28449672
      %v1145 = vadd.f32 %v1125, -0.28449672
      %v1146 = vadd.f32 %v1126, -0.28449672
      %v1147 = vadd.f32 %v1127, -0.28449672
      %v1148 = vadd.f32 %v1128, -0.28449672
      %v1149 = vadd.f32 %v1129, -0.28449672
      %v1150 = vadd.f32 %v1130, -0.28449672
      %v1151 = vadd.f32 %v1131, -0.28449672
      %v1152 = vadd.f32 %v1132, -0.28449672
      %v1153 = vadd.f32 %v1133, -0.28449672
      %v1154 = vadd.f32 %v1134, -0.28449672
      %v1155 = vmul.f32 %v1135, %v1015
      %v1156 = vmul.f32 %v1136, %v1016
      %v1157 = vmul.f32 %v1137, %v1017
      %v1158 = vmul.f32 %v1138, %v1018
      %v1159 = vmul.f32 %v1139, %v1019
      %v1160 = vmul.f32 %v1140, %v1020
      %v1161 = vmul.f32 %v1141, %v1021
      %v1162 = vmul.f32 %v1142, %v1022
      %v1163 = vmul.f32 %v1143, %v1023
      %v1164 = vmul.f32 %v1144, %v1024
      %v1165 = vmul.f32 %v1145, %v1025
      %v1166 = vmul.f32 %v1146, %v1026
      %v1167 = vmul.f32 %v1147, %v1027
      %v1168 = vmul.f32 %v1148, %v1028
      %v1169 = vmul.f32 %v1149, %v1029
      %v1170 = vmul.f32 %v1150, %v1030
      %v1171 = vmul.f32 %v1151, %v1031
      %v1172 = vmul.f32 %v1152, %v1032
      %v1173 = vmul.f32 %v1153, %v1033
      %v1174 = vmul.f32 %v1154, %v1034
      %v1175 = vadd.f32 %v1155, 0.2548296
      %v1176 = vadd.f32 %v1156, 0.2548296
      %v1177 = vadd.f32 %v1157, 0.2548296
      %v1178 = vadd.f32 %v1158, 0.2548296
      %v1179 = vadd.f32 %v1159, 0.2548296
      %v1180 = vadd.f32 %v1160, 0.2548296
      %v1181 = vadd.f32 %v1161, 0.2548296
      %v1182 = vadd.f32 %v1162, 0.2548296
      %v1183 = vadd.f32 %v1163, 0.2548296
      %v1184 = vadd.f32 %v1164, 0.2548296
      %v1185 = vadd.f32 %v1165, 0.2548296
      %v1186 = vadd.f32 %v1166, 0.2548296
      %v1187 = vadd.f32 %v1167, 0.2548296
      %v1188 = vadd.f32 %v1168, 0.2548296
      %v1189 = vadd.f32 %v1169, 0.2548296
      %v1190 = vadd.f32 %v1170, 0.2548296
      %v1191 = vadd.f32 %v1171, 0.2548296
      %v1192 = vadd.f32 %v1172, 0.2548296
      %v1193 = vadd.f32 %v1173, 0.2548296
      %v1194 = vadd.f32 %v1174, 0.2548296
      %v1195 = vmul.f32 %v1175, %v1015
      %v1196 = vmul.f32 %v1176, %v1016
      %v1197 = vmul.f32 %v1177, %v1017
      %v1198 = vmul.f32 %v1178, %v1018
      %v1199 = vmul.f32 %v1179, %v1019
      %v1200 = vmul.f32 %v1180, %v1020
      %v1201 = vmul.f32 %v1181, %v1021
      %v1202 = vmul.f32 %v1182, %v1022
      %v1203 = vmul.f32 %v1183, %v1023
      %v1204 = vmul.f32 %v1184, %v1024
      %v1205 = vmul.f32 %v1185, %v1025
      %v1206 = vmul.f32 %v1186, %v1026
      %v1207 = vmul.f32 %v1187, %v1027
      %v1208 = vmul.f32 %v1188, %v1028
      %v1209 = vmul.f32 %v1189, %v1029
      %v1210 = vmul.f32 %v1190, %v1030
      %v1211 = vmul.f32 %v1191, %v1031
      %v1212 = vmul.f32 %v1192, %v1032
      %v1213 = vmul.f32 %v1193, %v1033
      %v1214 = vmul.f32 %v1194, %v1034
      %v1215 = vsub.f32 0.0, %v955
      %v1216 = vsub.f32 0.0, %v956
      %v1217 = vsub.f32 0.0, %v957
      %v1218 = vsub.f32 0.0, %v958
      %v1219 = vsub.f32 0.0, %v959
      %v1220 = vsub.f32 0.0, %v960
      %v1221 = vsub.f32 0.0, %v961
      %v1222 = vsub.f32 0.0, %v962
      %v1223 = vsub.f32 0.0, %v963
      %v1224 = vsub.f32 0.0, %v964
      %v1225 = vsub.f32 0.0, %v965
      %v1226 = vsub.f32 0.0, %v966
      %v1227 = vsub.f32 0.0, %v967
      %v1228 = vsub.f32 0.0, %v968
      %v1229 = vsub.f32 0.0, %v969
      %v1230 = vsub.f32 0.0, %v970
      %v1231 = vsub.f32 0.0, %v971
      %v1232 = vsub.f32 0.0, %v972
      %v1233 = vsub.f32 0.0, %v973
      %v1234 = vsub.f32 0.0, %v974
      %v1235 = vmul.f32 %v1215, %v955
      %v1236 = vmul.f32 %v1216, %v956
      %v1237 = vmul.f32 %v1217, %v957
      %v1238 = vmul.f32 %v1218, %v958
      %v1239 = vmul.f32 %v1219, %v959
      %v1240 = vmul.f32 %v1220, %v960
      %v1241 = vmul.f32 %v1221, %v961
      %v1242 = vmul.f32 %v1222, %v962
      %v1243 = vmul.f32 %v1223, %v963
      %v1244 = vmul.f32 %v1224, %v964
      %v1245 = vmul.f32 %v1225, %v965
      %v1246 = vmul.f32 %v1226, %v966
      %v1247 = vmul.f32 %v1227, %v967
      %v1248 = vmul.f32 %v1228, %v968
      %v1249 = vmul.f32 %v1229, %v969
      %v1250 = vmul.f32 %v1230, %v970
      %v1251 = vmul.f32 %v1231, %v971
      %v1252 = vmul.f32 %v1232, %v972
      %v1253 = vmul.f32 %v1233, %v973
      %v1254 = vmul.f32 %v1234, %v974
      %v1255 = vmul.f32 %v1235, 1.442695
      %v1256 = vpow.pop %v1255
      %v1257 = vmul.f32 %v1236, 1.442695
      %v1258 = vpow.pop %v1257
      %v1259 = vmul.f32 %v1237, 1.442695
      %v1260 = vpow.pop %v1259
      %v1261 = vmul.f32 %v1238, 1.442695
      %v1262 = vpow.pop %v1261
      %v1263 = vmul.f32 %v1239, 1.442695
      %v1264 = vpow.pop %v1263
      %v1265 = vmul.f32 %v1240, 1.442695
      %v1266 = vpow.pop %v1265
      %v1267 = vmul.f32 %v1241, 1.442695
      %v1268 = vpow.pop %v1267
      %v1269 = vmul.f32 %v1242, 1.442695
      %v1270 = vpow.pop %v1269
      %v1271 = vmul.f32 %v1243, 1.442695
      %v1272 = vpow.pop %v1271
      %v1273 = vmul.f32 %v1244, 1.442695
      %v1274 = vpow.pop %v1273
      %v1275 = vmul.f32 %v1245, 1.442695
      %v1276 = vpow.pop %v1275
      %v1277 = vmul.f32 %v1246, 1.442695
      %v1278 = vpow.pop %v1277
      %v1279 = vmul.f32 %v1247, 1.442695
      %v1280 = vpow.pop %v1279
      %v1281 = vmul.f32 %v1248, 1.442695
      %v1282 = vpow.pop %v1281
      %v1283 = vmul.f32 %v1249, 1.442695
      %v1284 = vpow.pop %v1283
      %v1285 = vmul.f32 %v1250, 1.442695
      %v1286 = vpow.pop %v1285
      %v1287 = vmul.f32 %v1251, 1.442695
      %v1288 = vpow.pop %v1287
      %v1289 = vmul.f32 %v1252, 1.442695
      %v1290 = vpow.pop %v1289
      %v1291 = vmul.f32 %v1253, 1.442695
      %v1292 = vpow.pop %v1291
      %v1293 = vmul.f32 %v1254, 1.442695
      %v1294 = vpow.pop %v1293
      %v1295 = vmul.f32 %v1195, %v1256
      %v1296 = vmul.f32 %v1196, %v1258
      %v1297 = vmul.f32 %v1197, %v1260
      %v1298 = vmul.f32 %v1198, %v1262
      %v1299 = vmul.f32 %v1199, %v1264
      %v1300 = vmul.f32 %v1200, %v1266
      %v1301 = vmul.f32 %v1201, %v1268
      %v1302 = vmul.f32 %v1202, %v1270
      %v1303 = vmul.f32 %v1203, %v1272
      %v1304 = vmul.f32 %v1204, %v1274
      %v1305 = vmul.f32 %v1205, %v1276
      %v1306 = vmul.f32 %v1206, %v1278
      %v1307 = vmul.f32 %v1207, %v1280
      %v1308 = vmul.f32 %v1208, %v1282
      %v1309 = vmul.f32 %v1209, %v1284
      %v1310 = vmul.f32 %v1210, %v1286
      %v1311 = vmul.f32 %v1211, %v1288
      %v1312 = vmul.f32 %v1212, %v1290
      %v1313 = vmul.f32 %v1213, %v1292
      %v1314 = vmul.f32 %v1214, %v1294
      %v1315 = vsub.f32 1.0, %v1295
      %v1316 = vsub.f32 1.0, %v1296
      %v1317 = vsub.f32 1.0, %v1297
      %v1318 = vsub.f32 1.0, %v1298
      %v1319 = vsub.f32 1.0, %v1299
      %v1320 = vsub.f32 1.0, %v1300
      %v1321 = vsub.f32 1.0, %v1301
      %v1322 = vsub.f32 1.0, %v1302
      %v1323 = vsub.f32 1.0, %v1303
      %v1324 = vsub.f32 1.0, %v1304
      %v1325 = vsub.f32 1.0, %v1305
      %v1326 = vsub.f32 1.0, %v1306
      %v1327 = vsub.f32 1.0, %v1307
      %v1328 = vsub.f32 1.0, %v1308
      %v1329 = vsub.f32 1.0, %v1309
      %v1330 = vsub.f32 1.0, %v1310
      %v1331 = vsub.f32 1.0, %v1311
      %v1332 = vsub.f32 1.0, %v1312
      %v1333 = vsub.f32 1.0, %v1313
      %v1334 = vsub.f32 1.0, %v1314
      %v1335 = vmul.f32 %v935, %v1315
      %v1336 = vmul.f32 %v936, %v1316
      %v1337 = vmul.f32 %v937, %v1317
      %v1338 = vmul.f32 %v938, %v1318
      %v1339 = vmul.f32 %v939, %v1319
      %v1340 = vmul.f32 %v940, %v1320
      %v1341 = vmul.f32 %v941, %v1321
      %v1342 = vmul.f32 %v942, %v1322
      %v1343 = vmul.f32 %v943, %v1323
      %v1344 = vmul.f32 %v944, %v1324
      %v1345 = vmul.f32 %v945, %v1325
      %v1346 = vmul.f32 %v946, %v1326
      %v1347 = vmul.f32 %v947, %v1327
      %v1348 = vmul.f32 %v948, %v1328
      %v1349 = vmul.f32 %v949, %v1329
      %v1350 = vmul.f32 %v950, %v1330
      %v1351 = vmul.f32 %v951, %v1331
      %v1352 = vmul.f32 %v952, %v1332
      %v1353 = vmul.f32 %v953, %v1333
      %v1354 = vmul.f32 %v954, %v1334
      %v1355 = vadd.f32 %v1335, 1.0
      %v1356 = vadd.f32 %v1336, 1.0
      %v1357 = vadd.f32 %v1337, 1.0
      %v1358 = vadd.f32 %v1338, 1.0
      %v1359 = vadd.f32 %v1339, 1.0
      %v1360 = vadd.f32 %v1340, 1.0
      %v1361 = vadd.f32 %v1341, 1.0
      %v1362 = vadd.f32 %v1342, 1.0
      %v1363 = vadd.f32 %v1343, 1.0
      %v1364 = vadd.f32 %v1344, 1.0
      %v1365 = vadd.f32 %v1345, 1.0
      %v1366 = vadd.f32 %v1346, 1.0
      %v1367 = vadd.f32 %v1347, 1.0
      %v1368 = vadd.f32 %v1348, 1.0
      %v1369 = vadd.f32 %v1349, 1.0
      %v1370 = vadd.f32 %v1350, 1.0
      %v1371 = vadd.f32 %v1351, 1.0
      %v1372 = vadd.f32 %v1352, 1.0
      %v1373 = vadd.f32 %v1353, 1.0
      %v1374 = vadd.f32 %v1354, 1.0
      %v1375 = vmul.f32 %v875, %v1355
      %v1376 = vmul.f32 %v876, %v1356
      %v1377 = vmul.f32 %v877, %v1357
      %v1378 = vmul.f32 %v878, %v1358
      %v1379 = vmul.f32 %v879, %v1359
      %v1380 = vmul.f32 %v880, %v1360
      %v1381 = vmul.f32 %v881, %v1361
      %v1382 = vmul.f32 %v882, %v1362
      %v1383 = vmul.f32 %v883, %v1363
      %v1384 = vmul.f32 %v884, %v1364
      %v1385 = vmul.f32 %v885, %v1365
      %v1386 = vmul.f32 %v886, %v1366
      %v1387 = vmul.f32 %v887, %v1367
      %v1388 = vmul.f32 %v888, %v1368
      %v1389 = vmul.f32 %v889, %v1369
      %v1390 = vmul.f32 %v890, %v1370
      %v1391 = vmul.f32 %v891, %v1371
      %v1392 = vmul.f32 %v892, %v1372
      %v1393 = vmul.f32 %v893, %v1373
      %v1394 = vmul.f32 %v894, %v1374
      %s1395 = scalar_select %p360, 1, 0
      %v1396 = vstv %s1395
      %vm1397 = vcmp.eq.s32.totalorder %v1396, 1
      %s1398 = scalar_select %p361, 1, 0
      %v1399 = vstv %s1398
      %vm1400 = vcmp.eq.s32.totalorder %v1399, 1
      %v1401 = vsel %vm1397, %v1375, 0.0
      %v1402 = vsel %vm1397, %v1376, 0.0
      %v1403 = vsel 1, %v1377, 0.0
      %v1404 = vsel 1, %v1378, 0.0
      %v1405 = vsel 1, %v1379, 0.0
      %v1406 = vsel 1, %v1380, 0.0
      %v1407 = vsel 1, %v1381, 0.0
      %v1408 = vsel 1, %v1382, 0.0
      %v1409 = vsel 1, %v1383, 0.0
      %v1410 = vsel 1, %v1384, 0.0
      %v1411 = vsel 1, %v1385, 0.0
      %v1412 = vsel 1, %v1386, 0.0
      %v1413 = vsel 1, %v1387, 0.0
      %v1414 = vsel 1, %v1388, 0.0
      %v1415 = vsel 1, %v1389, 0.0
      %v1416 = vsel 1, %v1390, 0.0
      %v1417 = vsel 1, %v1391, 0.0
      %v1418 = vsel 1, %v1392, 0.0
      %v1419 = vsel %vm1400, %v1393, 0.0
      %v1420 = vsel %vm1400, %v1394, 0.0
      %vm1421 = vcmask 122880
      %1422 = vst.msk [vmem:[#allocation2] sm:$0x1] %vm1421, 0.0
      %1423 = vst.msk [vmem:[#allocation2 + $0x18] sm:$0x1] %vm1421, 0.0
      %1424 = vst.msk [vmem:[#allocation2 + $0x30] sm:$0x1] %vm1421, 0.0
      %1425 = vst.msk [vmem:[#allocation2 + $0x48] sm:$0x1] %vm1421, 0.0
      %1426 = vst.msk [vmem:[#allocation2 + $0x60] sm:$0x1] %vm1421, 0.0
      %1427 = vst.msk [vmem:[#allocation2 + $0x78] sm:$0x1] %vm1421, 0.0
      %1428 = vst.msk [vmem:[#allocation2 + $0x90] sm:$0x1] %vm1421, 0.0
      %1429 = vst.msk [vmem:[#allocation2 + $0xa8] sm:$0x1] %vm1421, 0.0
      %1430 = vst.msk [vmem:[#allocation2 + $0xc0] sm:$0x1] %vm1421, 0.0
      %1431 = vst.msk [vmem:[#allocation2 + $0xd8] sm:$0x1] %vm1421, 0.0
      %1432 = vst.msk [vmem:[#allocation2 + $0x11] sm:$0x1] %vm1421, 0.0
      %1433 = vst.msk [vmem:[#allocation2 + $0x29] sm:$0x1] %vm1421, 0.0
      %1434 = vst.msk [vmem:[#allocation2 + $0x41] sm:$0x1] %vm1421, 0.0
      %1435 = vst.msk [vmem:[#allocation2 + $0x59] sm:$0x1] %vm1421, 0.0
      %1436 = vst.msk [vmem:[#allocation2 + $0x71] sm:$0x1] %vm1421, 0.0
      %1437 = vst.msk [vmem:[#allocation2 + $0x89] sm:$0x1] %vm1421, 0.0
      %1438 = vst.msk [vmem:[#allocation2 + $0xa1] sm:$0x1] %vm1421, 0.0
      %1439 = vst.msk [vmem:[#allocation2 + $0xb9] sm:$0x1] %vm1421, 0.0
      %1440 = vst.msk [vmem:[#allocation2 + $0xd1] sm:$0x1] %vm1421, 0.0
      %1441 = vst.msk [vmem:[#allocation2 + $0xe9] sm:$0x1] %vm1421, 0.0
      %vm1442 = vcmask 130048
      %1443 = vst.msk [vmem:[#allocation2 + $0x1] sm:$0xff] %vm1442, %v1401
      %1444 = vst.msk [vmem:[#allocation2 + $0x9] sm:$0xff] %vm1442, %v1402
      %1445 = vst.msk [vmem:[#allocation2 + $0x19] sm:$0xff] %vm1442, %v1403
      %1446 = vst.msk [vmem:[#allocation2 + $0x21] sm:$0xff] %vm1442, %v1404
      %1447 = vst.msk [vmem:[#allocation2 + $0x31] sm:$0xff] %vm1442, %v1405
      %1448 = vst.msk [vmem:[#allocation2 + $0x39] sm:$0xff] %vm1442, %v1406
      %1449 = vst.msk [vmem:[#allocation2 + $0x49] sm:$0xff] %vm1442, %v1407
      %1450 = vst.msk [vmem:[#allocation2 + $0x51] sm:$0xff] %vm1442, %v1408
      %1451 = vst.msk [vmem:[#allocation2 + $0x61] sm:$0xff] %vm1442, %v1409
      %1452 = vst.msk [vmem:[#allocation2 + $0x69] sm:$0xff] %vm1442, %v1410
      %1453 = vst.msk [vmem:[#allocation2 + $0x79] sm:$0xff] %vm1442, %v1411
      %1454 = vst.msk [vmem:[#allocation2 + $0x81] sm:$0xff] %vm1442, %v1412
      %1455 = vst.msk [vmem:[#allocation2 + $0x91] sm:$0xff] %vm1442, %v1413
      %1456 = vst.msk [vmem:[#allocation2 + $0x99] sm:$0xff] %vm1442, %v1414
      %1457 = vst.msk [vmem:[#allocation2 + $0xa9] sm:$0xff] %vm1442, %v1415
      %1458 = vst.msk [vmem:[#allocation2 + $0xb1] sm:$0xff] %vm1442, %v1416
      %1459 = vst.msk [vmem:[#allocation2 + $0xc1] sm:$0xff] %vm1442, %v1417
      %1460 = vst.msk [vmem:[#allocation2 + $0xc9] sm:$0xff] %vm1442, %v1418
      %1461 = vst.msk [vmem:[#allocation2 + $0xd9] sm:$0xff] %vm1442, %v1419
      %1462 = vst.msk [vmem:[#allocation2 + $0xe1] sm:$0xff] %vm1442, %v1420
      %v1463 = vld [vmem:[%s5] sm:$0x7]
      %v1464 = vld [vmem:[%s5 + $0x4] sm:$0x7]
      %v1465 = vld [vmem:[%s5 + $0x8] sm:$0x7]
      %v1466 = vld [vmem:[#allocation2] sm:$0xff]
      %v1467 = vld [vmem:[#allocation2 + $0x8] sm:$0xff]
      %v1468 = vld [vmem:[#allocation2 + $0x18] sm:$0xff]
      %v1469 = vld [vmem:[#allocation2 + $0x20] sm:$0xff]
      %v1470 = vld [vmem:[#allocation2 + $0x30] sm:$0xff]
      %v1471 = vld [vmem:[#allocation2 + $0x38] sm:$0xff]
      %v1472 = vld [vmem:[#allocation2 + $0x48] sm:$0xff]
      %v1473 = vld [vmem:[#allocation2 + $0x50] sm:$0xff]
      %v1474 = vld [vmem:[#allocation2 + $0x60] sm:$0xff]
      %v1475 = vld [vmem:[#allocation2 + $0x68] sm:$0xff]
      %v1476 = vld [vmem:[#allocation2 + $0x78] sm:$0xff]
      %v1477 = vld [vmem:[#allocation2 + $0x80] sm:$0xff]
      %v1478 = vld [vmem:[#allocation2 + $0x90] sm:$0xff]
      %v1479 = vld [vmem:[#allocation2 + $0x98] sm:$0xff]
      %v1480 = vld [vmem:[#allocation2 + $0xa8] sm:$0xff]
      %v1481 = vld [vmem:[#allocation2 + $0xb0] sm:$0xff]
      %v1482 = vlaneseq
      %v1483 = vshrl.u32 %v1482, 7
      %v1484 = vsub.s32 0, %v1483
      %v1485 = vrot.slane %v1463, %v1484
      %v1486 = vmul.f32 %v1466, %v1485
      %v1487 = vmul.f32 %v1467, %v1485
      %v1488 = vmul.f32 %v1468, %v1485
      %v1489 = vmul.f32 %v1469, %v1485
      %v1490 = vmul.f32 %v1470, %v1485
      %v1491 = vmul.f32 %v1471, %v1485
      %v1492 = vmul.f32 %v1472, %v1485
      %v1493 = vmul.f32 %v1473, %v1485
      %v1494 = vmul.f32 %v1474, %v1485
      %v1495 = vmul.f32 %v1475, %v1485
      %v1496 = vmul.f32 %v1476, %v1485
      %v1497 = vmul.f32 %v1477, %v1485
      %v1498 = vmul.f32 %v1478, %v1485
      %v1499 = vmul.f32 %v1479, %v1485
      %v1500 = vmul.f32 %v1480, %v1485
      %v1501 = vmul.f32 %v1481, %v1485
      %v1502 = vld [vmem:[#allocation2 + $0x1] sm:$0xff]
      %v1503 = vld [vmem:[#allocation2 + $0x9] sm:$0xff]
      %v1504 = vld [vmem:[#allocation2 + $0x19] sm:$0xff]
      %v1505 = vld [vmem:[#allocation2 + $0x21] sm:$0xff]
      %v1506 = vld [vmem:[#allocation2 + $0x31] sm:$0xff]
      %v1507 = vld [vmem:[#allocation2 + $0x39] sm:$0xff]
      %v1508 = vld [vmem:[#allocation2 + $0x49] sm:$0xff]
      %v1509 = vld [vmem:[#allocation2 + $0x51] sm:$0xff]
      %v1510 = vld [vmem:[#allocation2 + $0x61] sm:$0xff]
      %v1511 = vld [vmem:[#allocation2 + $0x69] sm:$0xff]
      %v1512 = vld [vmem:[#allocation2 + $0x79] sm:$0xff]
      %v1513 = vld [vmem:[#allocation2 + $0x81] sm:$0xff]
      %v1514 = vld [vmem:[#allocation2 + $0x91] sm:$0xff]
      %v1515 = vld [vmem:[#allocation2 + $0x99] sm:$0xff]
      %v1516 = vld [vmem:[#allocation2 + $0xa9] sm:$0xff]
      %v1517 = vld [vmem:[#allocation2 + $0xb1] sm:$0xff]
      %v1518 = vlaneseq
      %v1519 = vshrl.u32 %v1518, 7
      %v1520 = vsub.s32 1, %v1519
      %v1521 = vrot.slane %v1463, %v1520
      %v1522 = vmul.f32 %v1502, %v1521
      %v1523 = vmul.f32 %v1503, %v1521
      %v1524 = vmul.f32 %v1504, %v1521
      %v1525 = vmul.f32 %v1505, %v1521
      %v1526 = vmul.f32 %v1506, %v1521
      %v1527 = vmul.f32 %v1507, %v1521
      %v1528 = vmul.f32 %v1508, %v1521
      %v1529 = vmul.f32 %v1509, %v1521
      %v1530 = vmul.f32 %v1510, %v1521
      %v1531 = vmul.f32 %v1511, %v1521
      %v1532 = vmul.f32 %v1512, %v1521
      %v1533 = vmul.f32 %v1513, %v1521
      %v1534 = vmul.f32 %v1514, %v1521
      %v1535 = vmul.f32 %v1515, %v1521
      %v1536 = vmul.f32 %v1516, %v1521
      %v1537 = vmul.f32 %v1517, %v1521
      %v1538 = vadd.f32 %v1486, %v1522
      %v1539 = vadd.f32 %v1487, %v1523
      %v1540 = vadd.f32 %v1488, %v1524
      %v1541 = vadd.f32 %v1489, %v1525
      %v1542 = vadd.f32 %v1490, %v1526
      %v1543 = vadd.f32 %v1491, %v1527
      %v1544 = vadd.f32 %v1492, %v1528
      %v1545 = vadd.f32 %v1493, %v1529
      %v1546 = vadd.f32 %v1494, %v1530
      %v1547 = vadd.f32 %v1495, %v1531
      %v1548 = vadd.f32 %v1496, %v1532
      %v1549 = vadd.f32 %v1497, %v1533
      %v1550 = vadd.f32 %v1498, %v1534
      %v1551 = vadd.f32 %v1499, %v1535
      %v1552 = vadd.f32 %v1500, %v1536
      %v1553 = vadd.f32 %v1501, %v1537
      %v1554 = vld [vmem:[#allocation2 + $0x2] sm:$0xff]
      %v1555 = vld [vmem:[#allocation2 + $0xa] sm:$0xff]
      %v1556 = vld [vmem:[#allocation2 + $0x1a] sm:$0xff]
      %v1557 = vld [vmem:[#allocation2 + $0x22] sm:$0xff]
      %v1558 = vld [vmem:[#allocation2 + $0x32] sm:$0xff]
      %v1559 = vld [vmem:[#allocation2 + $0x3a] sm:$0xff]
      %v1560 = vld [vmem:[#allocation2 + $0x4a] sm:$0xff]
      %v1561 = vld [vmem:[#allocation2 + $0x52] sm:$0xff]
      %v1562 = vld [vmem:[#allocation2 + $0x62] sm:$0xff]
      %v1563 = vld [vmem:[#allocation2 + $0x6a] sm:$0xff]
      %v1564 = vld [vmem:[#allocation2 + $0x7a] sm:$0xff]
      %v1565 = vld [vmem:[#allocation2 + $0x82] sm:$0xff]
      %v1566 = vld [vmem:[#allocation2 + $0x92] sm:$0xff]
      %v1567 = vld [vmem:[#allocation2 + $0x9a] sm:$0xff]
      %v1568 = vld [vmem:[#allocation2 + $0xaa] sm:$0xff]
      %v1569 = vld [vmem:[#allocation2 + $0xb2] sm:$0xff]
      %v1570 = vlaneseq
      %v1571 = vshrl.u32 %v1570, 7
      %v1572 = vsub.s32 2, %v1571
      %v1573 = vrot.slane %v1463, %v1572
      %v1574 = vmul.f32 %v1554, %v1573
      %v1575 = vmul.f32 %v1555, %v1573
      %v1576 = vmul.f32 %v1556, %v1573
      %v1577 = vmul.f32 %v1557, %v1573
      %v1578 = vmul.f32 %v1558, %v1573
      %v1579 = vmul.f32 %v1559, %v1573
      %v1580 = vmul.f32 %v1560, %v1573
      %v1581 = vmul.f32 %v1561, %v1573
      %v1582 = vmul.f32 %v1562, %v1573
      %v1583 = vmul.f32 %v1563, %v1573
      %v1584 = vmul.f32 %v1564, %v1573
      %v1585 = vmul.f32 %v1565, %v1573
      %v1586 = vmul.f32 %v1566, %v1573
      %v1587 = vmul.f32 %v1567, %v1573
      %v1588 = vmul.f32 %v1568, %v1573
      %v1589 = vmul.f32 %v1569, %v1573
      %v1590 = vadd.f32 %v1538, %v1574
      %v1591 = vadd.f32 %v1539, %v1575
      %v1592 = vadd.f32 %v1540, %v1576
      %v1593 = vadd.f32 %v1541, %v1577
      %v1594 = vadd.f32 %v1542, %v1578
      %v1595 = vadd.f32 %v1543, %v1579
      %v1596 = vadd.f32 %v1544, %v1580
      %v1597 = vadd.f32 %v1545, %v1581
      %v1598 = vadd.f32 %v1546, %v1582
      %v1599 = vadd.f32 %v1547, %v1583
      %v1600 = vadd.f32 %v1548, %v1584
      %v1601 = vadd.f32 %v1549, %v1585
      %v1602 = vadd.f32 %v1550, %v1586
      %v1603 = vadd.f32 %v1551, %v1587
      %v1604 = vadd.f32 %v1552, %v1588
      %v1605 = vadd.f32 %v1553, %v1589
      %s1606 = scalar_lea.vmem [#allocation2], 24
      %v1607 = vld [vmem:[%s1606] sm:$0xff]
      %v1608 = vld [vmem:[%s1606 + $0x8] sm:$0xff]
      %v1609 = vld [vmem:[%s1606 + $0x18] sm:$0xff]
      %v1610 = vld [vmem:[%s1606 + $0x20] sm:$0xff]
      %v1611 = vld [vmem:[%s1606 + $0x30] sm:$0xff]
      %v1612 = vld [vmem:[%s1606 + $0x38] sm:$0xff]
      %v1613 = vld [vmem:[%s1606 + $0x48] sm:$0xff]
      %v1614 = vld [vmem:[%s1606 + $0x50] sm:$0xff]
      %v1615 = vld [vmem:[%s1606 + $0x60] sm:$0xff]
      %v1616 = vld [vmem:[%s1606 + $0x68] sm:$0xff]
      %v1617 = vld [vmem:[%s1606 + $0x78] sm:$0xff]
      %v1618 = vld [vmem:[%s1606 + $0x80] sm:$0xff]
      %v1619 = vld [vmem:[%s1606 + $0x90] sm:$0xff]
      %v1620 = vld [vmem:[%s1606 + $0x98] sm:$0xff]
      %v1621 = vld [vmem:[%s1606 + $0xa8] sm:$0xff]
      %v1622 = vld [vmem:[%s1606 + $0xb0] sm:$0xff]
      %v1623 = vlaneseq
      %v1624 = vshrl.u32 %v1623, 7
      %v1625 = vsub.s32 0, %v1624
      %v1626 = vrot.slane %v1464, %v1625
      %v1627 = vmul.f32 %v1607, %v1626
      %v1628 = vmul.f32 %v1608, %v1626
      %v1629 = vmul.f32 %v1609, %v1626
      %v1630 = vmul.f32 %v1610, %v1626
      %v1631 = vmul.f32 %v1611, %v1626
      %v1632 = vmul.f32 %v1612, %v1626
      %v1633 = vmul.f32 %v1613, %v1626
      %v1634 = vmul.f32 %v1614, %v1626
      %v1635 = vmul.f32 %v1615, %v1626
      %v1636 = vmul.f32 %v1616, %v1626
      %v1637 = vmul.f32 %v1617, %v1626
      %v1638 = vmul.f32 %v1618, %v1626
      %v1639 = vmul.f32 %v1619, %v1626
      %v1640 = vmul.f32 %v1620, %v1626
      %v1641 = vmul.f32 %v1621, %v1626
      %v1642 = vmul.f32 %v1622, %v1626
      %v1643 = vld [vmem:[%s1606 + $0x1] sm:$0xff]
      %v1644 = vld [vmem:[%s1606 + $0x9] sm:$0xff]
      %v1645 = vld [vmem:[%s1606 + $0x19] sm:$0xff]
      %v1646 = vld [vmem:[%s1606 + $0x21] sm:$0xff]
      %v1647 = vld [vmem:[%s1606 + $0x31] sm:$0xff]
      %v1648 = vld [vmem:[%s1606 + $0x39] sm:$0xff]
      %v1649 = vld [vmem:[%s1606 + $0x49] sm:$0xff]
      %v1650 = vld [vmem:[%s1606 + $0x51] sm:$0xff]
      %v1651 = vld [vmem:[%s1606 + $0x61] sm:$0xff]
      %v1652 = vld [vmem:[%s1606 + $0x69] sm:$0xff]
      %v1653 = vld [vmem:[%s1606 + $0x79] sm:$0xff]
      %v1654 = vld [vmem:[%s1606 + $0x81] sm:$0xff]
      %v1655 = vld [vmem:[%s1606 + $0x91] sm:$0xff]
      %v1656 = vld [vmem:[%s1606 + $0x99] sm:$0xff]
      %v1657 = vld [vmem:[%s1606 + $0xa9] sm:$0xff]
      %v1658 = vld [vmem:[%s1606 + $0xb1] sm:$0xff]
      %v1659 = vlaneseq
      %v1660 = vshrl.u32 %v1659, 7
      %v1661 = vsub.s32 1, %v1660
      %v1662 = vrot.slane %v1464, %v1661
      %v1663 = vmul.f32 %v1643, %v1662
      %v1664 = vmul.f32 %v1644, %v1662
      %v1665 = vmul.f32 %v1645, %v1662
      %v1666 = vmul.f32 %v1646, %v1662
      %v1667 = vmul.f32 %v1647, %v1662
      %v1668 = vmul.f32 %v1648, %v1662
      %v1669 = vmul.f32 %v1649, %v1662
      %v1670 = vmul.f32 %v1650, %v1662
      %v1671 = vmul.f32 %v1651, %v1662
      %v1672 = vmul.f32 %v1652, %v1662
      %v1673 = vmul.f32 %v1653, %v1662
      %v1674 = vmul.f32 %v1654, %v1662
      %v1675 = vmul.f32 %v1655, %v1662
      %v1676 = vmul.f32 %v1656, %v1662
      %v1677 = vmul.f32 %v1657, %v1662
      %v1678 = vmul.f32 %v1658, %v1662
      %v1679 = vadd.f32 %v1627, %v1663
      %v1680 = vadd.f32 %v1628, %v1664
      %v1681 = vadd.f32 %v1629, %v1665
      %v1682 = vadd.f32 %v1630, %v1666
      %v1683 = vadd.f32 %v1631, %v1667
      %v1684 = vadd.f32 %v1632, %v1668
      %v1685 = vadd.f32 %v1633, %v1669
      %v1686 = vadd.f32 %v1634, %v1670
      %v1687 = vadd.f32 %v1635, %v1671
      %v1688 = vadd.f32 %v1636, %v1672
      %v1689 = vadd.f32 %v1637, %v1673
      %v1690 = vadd.f32 %v1638, %v1674
      %v1691 = vadd.f32 %v1639, %v1675
      %v1692 = vadd.f32 %v1640, %v1676
      %v1693 = vadd.f32 %v1641, %v1677
      %v1694 = vadd.f32 %v1642, %v1678
      %v1695 = vld [vmem:[%s1606 + $0x2] sm:$0xff]
      %v1696 = vld [vmem:[%s1606 + $0xa] sm:$0xff]
      %v1697 = vld [vmem:[%s1606 + $0x1a] sm:$0xff]
      %v1698 = vld [vmem:[%s1606 + $0x22] sm:$0xff]
      %v1699 = vld [vmem:[%s1606 + $0x32] sm:$0xff]
      %v1700 = vld [vmem:[%s1606 + $0x3a] sm:$0xff]
      %v1701 = vld [vmem:[%s1606 + $0x4a] sm:$0xff]
      %v1702 = vld [vmem:[%s1606 + $0x52] sm:$0xff]
      %v1703 = vld [vmem:[%s1606 + $0x62] sm:$0xff]
      %v1704 = vld [vmem:[%s1606 + $0x6a] sm:$0xff]
      %v1705 = vld [vmem:[%s1606 + $0x7a] sm:$0xff]
      %v1706 = vld [vmem:[%s1606 + $0x82] sm:$0xff]
      %v1707 = vld [vmem:[%s1606 + $0x92] sm:$0xff]
      %v1708 = vld [vmem:[%s1606 + $0x9a] sm:$0xff]
      %v1709 = vld [vmem:[%s1606 + $0xaa] sm:$0xff]
      %v1710 = vld [vmem:[%s1606 + $0xb2] sm:$0xff]
      %v1711 = vlaneseq
      %v1712 = vshrl.u32 %v1711, 7
      %v1713 = vsub.s32 2, %v1712
      %v1714 = vrot.slane %v1464, %v1713
      %v1715 = vmul.f32 %v1695, %v1714
      %v1716 = vmul.f32 %v1696, %v1714
      %v1717 = vmul.f32 %v1697, %v1714
      %v1718 = vmul.f32 %v1698, %v1714
      %v1719 = vmul.f32 %v1699, %v1714
      %v1720 = vmul.f32 %v1700, %v1714
      %v1721 = vmul.f32 %v1701, %v1714
      %v1722 = vmul.f32 %v1702, %v1714
      %v1723 = vmul.f32 %v1703, %v1714
      %v1724 = vmul.f32 %v1704, %v1714
      %v1725 = vmul.f32 %v1705, %v1714
      %v1726 = vmul.f32 %v1706, %v1714
      %v1727 = vmul.f32 %v1707, %v1714
      %v1728 = vmul.f32 %v1708, %v1714
      %v1729 = vmul.f32 %v1709, %v1714
      %v1730 = vmul.f32 %v1710, %v1714
      %v1731 = vadd.f32 %v1679, %v1715
      %v1732 = vadd.f32 %v1680, %v1716
      %v1733 = vadd.f32 %v1681, %v1717
      %v1734 = vadd.f32 %v1682, %v1718
      %v1735 = vadd.f32 %v1683, %v1719
      %v1736 = vadd.f32 %v1684, %v1720
      %v1737 = vadd.f32 %v1685, %v1721
      %v1738 = vadd.f32 %v1686, %v1722
      %v1739 = vadd.f32 %v1687, %v1723
      %v1740 = vadd.f32 %v1688, %v1724
      %v1741 = vadd.f32 %v1689, %v1725
      %v1742 = vadd.f32 %v1690, %v1726
      %v1743 = vadd.f32 %v1691, %v1727
      %v1744 = vadd.f32 %v1692, %v1728
      %v1745 = vadd.f32 %v1693, %v1729
      %v1746 = vadd.f32 %v1694, %v1730
      %s1747 = scalar_lea.vmem [#allocation2], 48
      %v1748 = vld [vmem:[%s1747] sm:$0xff]
      %v1749 = vld [vmem:[%s1747 + $0x8] sm:$0xff]
      %v1750 = vld [vmem:[%s1747 + $0x18] sm:$0xff]
      %v1751 = vld [vmem:[%s1747 + $0x20] sm:$0xff]
      %v1752 = vld [vmem:[%s1747 + $0x30] sm:$0xff]
      %v1753 = vld [vmem:[%s1747 + $0x38] sm:$0xff]
      %v1754 = vld [vmem:[%s1747 + $0x48] sm:$0xff]
      %v1755 = vld [vmem:[%s1747 + $0x50] sm:$0xff]
      %v1756 = vld [vmem:[%s1747 + $0x60] sm:$0xff]
      %v1757 = vld [vmem:[%s1747 + $0x68] sm:$0xff]
      %v1758 = vld [vmem:[%s1747 + $0x78] sm:$0xff]
      %v1759 = vld [vmem:[%s1747 + $0x80] sm:$0xff]
      %v1760 = vld [vmem:[%s1747 + $0x90] sm:$0xff]
      %v1761 = vld [vmem:[%s1747 + $0x98] sm:$0xff]
      %v1762 = vld [vmem:[%s1747 + $0xa8] sm:$0xff]
      %v1763 = vld [vmem:[%s1747 + $0xb0] sm:$0xff]
      %v1764 = vlaneseq
      %v1765 = vshrl.u32 %v1764, 7
      %v1766 = vsub.s32 0, %v1765
      %v1767 = vrot.slane %v1465, %v1766
      %v1768 = vmul.f32 %v1748, %v1767
      %v1769 = vmul.f32 %v1749, %v1767
      %v1770 = vmul.f32 %v1750, %v1767
      %v1771 = vmul.f32 %v1751, %v1767
      %v1772 = vmul.f32 %v1752, %v1767
      %v1773 = vmul.f32 %v1753, %v1767
      %v1774 = vmul.f32 %v1754, %v1767
      %v1775 = vmul.f32 %v1755, %v1767
      %v1776 = vmul.f32 %v1756, %v1767
      %v1777 = vmul.f32 %v1757, %v1767
      %v1778 = vmul.f32 %v1758, %v1767
      %v1779 = vmul.f32 %v1759, %v1767
      %v1780 = vmul.f32 %v1760, %v1767
      %v1781 = vmul.f32 %v1761, %v1767
      %v1782 = vmul.f32 %v1762, %v1767
      %v1783 = vmul.f32 %v1763, %v1767
      %v1784 = vld [vmem:[%s1747 + $0x1] sm:$0xff]
      %v1785 = vld [vmem:[%s1747 + $0x9] sm:$0xff]
      %v1786 = vld [vmem:[%s1747 + $0x19] sm:$0xff]
      %v1787 = vld [vmem:[%s1747 + $0x21] sm:$0xff]
      %v1788 = vld [vmem:[%s1747 + $0x31] sm:$0xff]
      %v1789 = vld [vmem:[%s1747 + $0x39] sm:$0xff]
      %v1790 = vld [vmem:[%s1747 + $0x49] sm:$0xff]
      %v1791 = vld [vmem:[%s1747 + $0x51] sm:$0xff]
      %v1792 = vld [vmem:[%s1747 + $0x61] sm:$0xff]
      %v1793 = vld [vmem:[%s1747 + $0x69] sm:$0xff]
      %v1794 = vld [vmem:[%s1747 + $0x79] sm:$0xff]
      %v1795 = vld [vmem:[%s1747 + $0x81] sm:$0xff]
      %v1796 = vld [vmem:[%s1747 + $0x91] sm:$0xff]
      %v1797 = vld [vmem:[%s1747 + $0x99] sm:$0xff]
      %v1798 = vld [vmem:[%s1747 + $0xa9] sm:$0xff]
      %v1799 = vld [vmem:[%s1747 + $0xb1] sm:$0xff]
      %v1800 = vlaneseq
      %v1801 = vshrl.u32 %v1800, 7
      %v1802 = vsub.s32 1, %v1801
      %v1803 = vrot.slane %v1465, %v1802
      %v1804 = vmul.f32 %v1784, %v1803
      %v1805 = vmul.f32 %v1785, %v1803
      %v1806 = vmul.f32 %v1786, %v1803
      %v1807 = vmul.f32 %v1787, %v1803
      %v1808 = vmul.f32 %v1788, %v1803
      %v1809 = vmul.f32 %v1789, %v1803
      %v1810 = vmul.f32 %v1790, %v1803
      %v1811 = vmul.f32 %v1791, %v1803
      %v1812 = vmul.f32 %v1792, %v1803
      %v1813 = vmul.f32 %v1793, %v1803
      %v1814 = vmul.f32 %v1794, %v1803
      %v1815 = vmul.f32 %v1795, %v1803
      %v1816 = vmul.f32 %v1796, %v1803
      %v1817 = vmul.f32 %v1797, %v1803
      %v1818 = vmul.f32 %v1798, %v1803
      %v1819 = vmul.f32 %v1799, %v1803
      %v1820 = vadd.f32 %v1768, %v1804
      %v1821 = vadd.f32 %v1769, %v1805
      %v1822 = vadd.f32 %v1770, %v1806
      %v1823 = vadd.f32 %v1771, %v1807
      %v1824 = vadd.f32 %v1772, %v1808
      %v1825 = vadd.f32 %v1773, %v1809
      %v1826 = vadd.f32 %v1774, %v1810
      %v1827 = vadd.f32 %v1775, %v1811
      %v1828 = vadd.f32 %v1776, %v1812
      %v1829 = vadd.f32 %v1777, %v1813
      %v1830 = vadd.f32 %v1778, %v1814
      %v1831 = vadd.f32 %v1779, %v1815
      %v1832 = vadd.f32 %v1780, %v1816
      %v1833 = vadd.f32 %v1781, %v1817
      %v1834 = vadd.f32 %v1782, %v1818
      %v1835 = vadd.f32 %v1783, %v1819
      %v1836 = vld [vmem:[%s1747 + $0x2] sm:$0xff]
      %v1837 = vld [vmem:[%s1747 + $0xa] sm:$0xff]
      %v1838 = vld [vmem:[%s1747 + $0x1a] sm:$0xff]
      %v1839 = vld [vmem:[%s1747 + $0x22] sm:$0xff]
      %v1840 = vld [vmem:[%s1747 + $0x32] sm:$0xff]
      %v1841 = vld [vmem:[%s1747 + $0x3a] sm:$0xff]
      %v1842 = vld [vmem:[%s1747 + $0x4a] sm:$0xff]
      %v1843 = vld [vmem:[%s1747 + $0x52] sm:$0xff]
      %v1844 = vld [vmem:[%s1747 + $0x62] sm:$0xff]
      %v1845 = vld [vmem:[%s1747 + $0x6a] sm:$0xff]
      %v1846 = vld [vmem:[%s1747 + $0x7a] sm:$0xff]
      %v1847 = vld [vmem:[%s1747 + $0x82] sm:$0xff]
      %v1848 = vld [vmem:[%s1747 + $0x92] sm:$0xff]
      %v1849 = vld [vmem:[%s1747 + $0x9a] sm:$0xff]
      %v1850 = vld [vmem:[%s1747 + $0xaa] sm:$0xff]
      %v1851 = vld [vmem:[%s1747 + $0xb2] sm:$0xff]
      %v1852 = vlaneseq
      %v1853 = vshrl.u32 %v1852, 7
      %v1854 = vsub.s32 2, %v1853
      %v1855 = vrot.slane %v1465, %v1854
      %v1856 = vmul.f32 %v1836, %v1855
      %v1857 = vmul.f32 %v1837, %v1855
      %v1858 = vmul.f32 %v1838, %v1855
      %v1859 = vmul.f32 %v1839, %v1855
      %v1860 = vmul.f32 %v1840, %v1855
      %v1861 = vmul.f32 %v1841, %v1855
      %v1862 = vmul.f32 %v1842, %v1855
      %v1863 = vmul.f32 %v1843, %v1855
      %v1864 = vmul.f32 %v1844, %v1855
      %v1865 = vmul.f32 %v1845, %v1855
      %v1866 = vmul.f32 %v1846, %v1855
      %v1867 = vmul.f32 %v1847, %v1855
      %v1868 = vmul.f32 %v1848, %v1855
      %v1869 = vmul.f32 %v1849, %v1855
      %v1870 = vmul.f32 %v1850, %v1855
      %v1871 = vmul.f32 %v1851, %v1855
      %v1872 = vadd.f32 %v1820, %v1856
      %v1873 = vadd.f32 %v1821, %v1857
      %v1874 = vadd.f32 %v1822, %v1858
      %v1875 = vadd.f32 %v1823, %v1859
      %v1876 = vadd.f32 %v1824, %v1860
      %v1877 = vadd.f32 %v1825, %v1861
      %v1878 = vadd.f32 %v1826, %v1862
      %v1879 = vadd.f32 %v1827, %v1863
      %v1880 = vadd.f32 %v1828, %v1864
      %v1881 = vadd.f32 %v1829, %v1865
      %v1882 = vadd.f32 %v1830, %v1866
      %v1883 = vadd.f32 %v1831, %v1867
      %v1884 = vadd.f32 %v1832, %v1868
      %v1885 = vadd.f32 %v1833, %v1869
      %v1886 = vadd.f32 %v1834, %v1870
      %v1887 = vadd.f32 %v1835, %v1871
      %v1888 = vld [vmem:[%s6] sm:$0x1]
      %v1889 = vadd.f32 %v1590, %v1731
      %v1890 = vadd.f32 %v1591, %v1732
      %v1891 = vadd.f32 %v1592, %v1733
      %v1892 = vadd.f32 %v1593, %v1734
      %v1893 = vadd.f32 %v1594, %v1735
      %v1894 = vadd.f32 %v1595, %v1736
      %v1895 = vadd.f32 %v1596, %v1737
      %v1896 = vadd.f32 %v1597, %v1738
      %v1897 = vadd.f32 %v1598, %v1739
      %v1898 = vadd.f32 %v1599, %v1740
      %v1899 = vadd.f32 %v1600, %v1741
      %v1900 = vadd.f32 %v1601, %v1742
      %v1901 = vadd.f32 %v1602, %v1743
      %v1902 = vadd.f32 %v1603, %v1744
      %v1903 = vadd.f32 %v1604, %v1745
      %v1904 = vadd.f32 %v1605, %v1746
      %v1906 = vlaneseq
      %v1907 = vshrl.u32 %v1906, 7
      %v1908 = vsub.s32 0, %v1907
      %v1909 = vrot.slane %v1888, %v1908
      %v1911 = vadd.f32 %v1909, %v1889
      %v1912 = vadd.f32 %v1909, %v1890
      %v1913 = vadd.f32 %v1909, %v1891
      %v1914 = vadd.f32 %v1909, %v1892
      %v1915 = vadd.f32 %v1909, %v1893
      %v1916 = vadd.f32 %v1909, %v1894
      %v1917 = vadd.f32 %v1909, %v1895
      %v1918 = vadd.f32 %v1909, %v1896
      %v1919 = vadd.f32 %v1909, %v1897
      %v1920 = vadd.f32 %v1909, %v1898
      %v1921 = vadd.f32 %v1909, %v1899
      %v1922 = vadd.f32 %v1909, %v1900
      %v1923 = vadd.f32 %v1909, %v1901
      %v1924 = vadd.f32 %v1909, %v1902
      %v1925 = vadd.f32 %v1909, %v1903
      %v1926 = vadd.f32 %v1909, %v1904
      %v1927 = vadd.f32 %v1911, %v1872
      %v1928 = vadd.f32 %v1912, %v1873
      %v1929 = vadd.f32 %v1913, %v1874
      %v1930 = vadd.f32 %v1914, %v1875
      %v1931 = vadd.f32 %v1915, %v1876
      %v1932 = vadd.f32 %v1916, %v1877
      %v1933 = vadd.f32 %v1917, %v1878
      %v1934 = vadd.f32 %v1918, %v1879
      %v1935 = vadd.f32 %v1919, %v1880
      %v1936 = vadd.f32 %v1920, %v1881
      %v1937 = vadd.f32 %v1921, %v1882
      %v1938 = vadd.f32 %v1922, %v1883
      %v1939 = vadd.f32 %v1923, %v1884
      %v1940 = vadd.f32 %v1924, %v1885
      %v1941 = vadd.f32 %v1925, %v1886
      %v1942 = vadd.f32 %v1926, %v1887
      %v1943 = vmul.f32 %v1927, 0.5
      %v1944 = vmul.f32 %v1928, 0.5
      %v1945 = vmul.f32 %v1929, 0.5
      %v1946 = vmul.f32 %v1930, 0.5
      %v1947 = vmul.f32 %v1931, 0.5
      %v1948 = vmul.f32 %v1932, 0.5
      %v1949 = vmul.f32 %v1933, 0.5
      %v1950 = vmul.f32 %v1934, 0.5
      %v1951 = vmul.f32 %v1935, 0.5
      %v1952 = vmul.f32 %v1936, 0.5
      %v1953 = vmul.f32 %v1937, 0.5
      %v1954 = vmul.f32 %v1938, 0.5
      %v1955 = vmul.f32 %v1939, 0.5
      %v1956 = vmul.f32 %v1940, 0.5
      %v1957 = vmul.f32 %v1941, 0.5
      %v1958 = vmul.f32 %v1942, 0.5
      %v1959 = vmul.f32 %v1927, 0.70710677
      %v1960 = vmul.f32 %v1928, 0.70710677
      %v1961 = vmul.f32 %v1929, 0.70710677
      %v1962 = vmul.f32 %v1930, 0.70710677
      %v1963 = vmul.f32 %v1931, 0.70710677
      %v1964 = vmul.f32 %v1932, 0.70710677
      %v1965 = vmul.f32 %v1933, 0.70710677
      %v1966 = vmul.f32 %v1934, 0.70710677
      %v1967 = vmul.f32 %v1935, 0.70710677
      %v1968 = vmul.f32 %v1936, 0.70710677
      %v1969 = vmul.f32 %v1937, 0.70710677
      %v1970 = vmul.f32 %v1938, 0.70710677
      %v1971 = vmul.f32 %v1939, 0.70710677
      %v1972 = vmul.f32 %v1940, 0.70710677
      %v1973 = vmul.f32 %v1941, 0.70710677
      %v1974 = vmul.f32 %v1942, 0.70710677
      %vm1975 = vcmp.ge.f32.partialorder %v1959, 0.0
      %vm1976 = vcmp.ge.f32.partialorder %v1960, 0.0
      %vm1977 = vcmp.ge.f32.partialorder %v1961, 0.0
      %vm1978 = vcmp.ge.f32.partialorder %v1962, 0.0
      %vm1979 = vcmp.ge.f32.partialorder %v1963, 0.0
      %vm1980 = vcmp.ge.f32.partialorder %v1964, 0.0
      %vm1981 = vcmp.ge.f32.partialorder %v1965, 0.0
      %vm1982 = vcmp.ge.f32.partialorder %v1966, 0.0
      %vm1983 = vcmp.ge.f32.partialorder %v1967, 0.0
      %vm1984 = vcmp.ge.f32.partialorder %v1968, 0.0
      %vm1985 = vcmp.ge.f32.partialorder %v1969, 0.0
      %vm1986 = vcmp.ge.f32.partialorder %v1970, 0.0
      %vm1987 = vcmp.ge.f32.partialorder %v1971, 0.0
      %vm1988 = vcmp.ge.f32.partialorder %v1972, 0.0
      %vm1989 = vcmp.ge.f32.partialorder %v1973, 0.0
      %vm1990 = vcmp.ge.f32.partialorder %v1974, 0.0
      %v1991 = vsel %vm1975, 1.0, -1.0
      %v1992 = vsel %vm1976, 1.0, -1.0
      %v1993 = vsel %vm1977, 1.0, -1.0
      %v1994 = vsel %vm1978, 1.0, -1.0
      %v1995 = vsel %vm1979, 1.0, -1.0
      %v1996 = vsel %vm1980, 1.0, -1.0
      %v1997 = vsel %vm1981, 1.0, -1.0
      %v1998 = vsel %vm1982, 1.0, -1.0
      %v1999 = vsel %vm1983, 1.0, -1.0
      %v2000 = vsel %vm1984, 1.0, -1.0
      %v2001 = vsel %vm1985, 1.0, -1.0
      %v2002 = vsel %vm1986, 1.0, -1.0
      %v2003 = vsel %vm1987, 1.0, -1.0
      %v2004 = vsel %vm1988, 1.0, -1.0
      %v2005 = vsel %vm1989, 1.0, -1.0
      %v2006 = vsel %vm1990, 1.0, -1.0
      %v2007 = vand.u32 2147483647, %v1959
      %v2008 = vand.u32 2147483647, %v1960
      %v2009 = vand.u32 2147483647, %v1961
      %v2010 = vand.u32 2147483647, %v1962
      %v2011 = vand.u32 2147483647, %v1963
      %v2012 = vand.u32 2147483647, %v1964
      %v2013 = vand.u32 2147483647, %v1965
      %v2014 = vand.u32 2147483647, %v1966
      %v2015 = vand.u32 2147483647, %v1967
      %v2016 = vand.u32 2147483647, %v1968
      %v2017 = vand.u32 2147483647, %v1969
      %v2018 = vand.u32 2147483647, %v1970
      %v2019 = vand.u32 2147483647, %v1971
      %v2020 = vand.u32 2147483647, %v1972
      %v2021 = vand.u32 2147483647, %v1973
      %v2022 = vand.u32 2147483647, %v1974
      %v2023 = vmul.f32 %v2007, 0.3275911
      %v2024 = vmul.f32 %v2008, 0.3275911
      %v2025 = vmul.f32 %v2009, 0.3275911
      %v2026 = vmul.f32 %v2010, 0.3275911
      %v2027 = vmul.f32 %v2011, 0.3275911
      %v2028 = vmul.f32 %v2012, 0.3275911
      %v2029 = vmul.f32 %v2013, 0.3275911
      %v2030 = vmul.f32 %v2014, 0.3275911
      %v2031 = vmul.f32 %v2015, 0.3275911
      %v2032 = vmul.f32 %v2016, 0.3275911
      %v2033 = vmul.f32 %v2017, 0.3275911
      %v2034 = vmul.f32 %v2018, 0.3275911
      %v2035 = vmul.f32 %v2019, 0.3275911
      %v2036 = vmul.f32 %v2020, 0.3275911
      %v2037 = vmul.f32 %v2021, 0.3275911
      %v2038 = vmul.f32 %v2022, 0.3275911
      %v2039 = vadd.f32 %v2023, 1.0
      %v2040 = vadd.f32 %v2024, 1.0
      %v2041 = vadd.f32 %v2025, 1.0
      %v2042 = vadd.f32 %v2026, 1.0
      %v2043 = vadd.f32 %v2027, 1.0
      %v2044 = vadd.f32 %v2028, 1.0
      %v2045 = vadd.f32 %v2029, 1.0
      %v2046 = vadd.f32 %v2030, 1.0
      %v2047 = vadd.f32 %v2031, 1.0
      %v2048 = vadd.f32 %v2032, 1.0
      %v2049 = vadd.f32 %v2033, 1.0
      %v2050 = vadd.f32 %v2034, 1.0
      %v2051 = vadd.f32 %v2035, 1.0
      %v2052 = vadd.f32 %v2036, 1.0
      %v2053 = vadd.f32 %v2037, 1.0
      %v2054 = vadd.f32 %v2038, 1.0
      %v2055 = vrcp.pop %v2039
      %v2056 = vrcp.pop %v2040
      %v2057 = vrcp.pop %v2041
      %v2058 = vrcp.pop %v2042
      %v2059 = vrcp.pop %v2043
      %v2060 = vrcp.pop %v2044
      %v2061 = vrcp.pop %v2045
      %v2062 = vrcp.pop %v2046
      %v2063 = vrcp.pop %v2047
      %v2064 = vrcp.pop %v2048
      %v2065 = vrcp.pop %v2049
      %v2066 = vrcp.pop %v2050
      %v2067 = vrcp.pop %v2051
      %v2068 = vrcp.pop %v2052
      %v2069 = vrcp.pop %v2053
      %v2070 = vrcp.pop %v2054
      %v2071 = vmul.f32 %v2055, 1.0614054
      %v2072 = vmul.f32 %v2056, 1.0614054
      %v2073 = vmul.f32 %v2057, 1.0614054
      %v2074 = vmul.f32 %v2058, 1.0614054
      %v2075 = vmul.f32 %v2059, 1.0614054
      %v2076 = vmul.f32 %v2060, 1.0614054
      %v2077 = vmul.f32 %v2061, 1.0614054
      %v2078 = vmul.f32 %v2062, 1.0614054
      %v2079 = vmul.f32 %v2063, 1.0614054
      %v2080 = vmul.f32 %v2064, 1.0614054
      %v2081 = vmul.f32 %v2065, 1.0614054
      %v2082 = vmul.f32 %v2066, 1.0614054
      %v2083 = vmul.f32 %v2067, 1.0614054
      %v2084 = vmul.f32 %v2068, 1.0614054
      %v2085 = vmul.f32 %v2069, 1.0614054
      %v2086 = vmul.f32 %v2070, 1.0614054
      %v2087 = vadd.f32 %v2071, -1.4531521
      %v2088 = vadd.f32 %v2072, -1.4531521
      %v2089 = vadd.f32 %v2073, -1.4531521
      %v2090 = vadd.f32 %v2074, -1.4531521
      %v2091 = vadd.f32 %v2075, -1.4531521
      %v2092 = vadd.f32 %v2076, -1.4531521
      %v2093 = vadd.f32 %v2077, -1.4531521
      %v2094 = vadd.f32 %v2078, -1.4531521
      %v2095 = vadd.f32 %v2079, -1.4531521
      %v2096 = vadd.f32 %v2080, -1.4531521
      %v2097 = vadd.f32 %v2081, -1.4531521
      %v2098 = vadd.f32 %v2082, -1.4531521
      %v2099 = vadd.f32 %v2083, -1.4531521
      %v2100 = vadd.f32 %v2084, -1.4531521
      %v2101 = vadd.f32 %v2085, -1.4531521
      %v2102 = vadd.f32 %v2086, -1.4531521
      %v2103 = vmul.f32 %v2087, %v2055
      %v2104 = vmul.f32 %v2088, %v2056
      %v2105 = vmul.f32 %v2089, %v2057
      %v2106 = vmul.f32 %v2090, %v2058
      %v2107 = vmul.f32 %v2091, %v2059
      %v2108 = vmul.f32 %v2092, %v2060
      %v2109 = vmul.f32 %v2093, %v2061
      %v2110 = vmul.f32 %v2094, %v2062
      %v2111 = vmul.f32 %v2095, %v2063
      %v2112 = vmul.f32 %v2096, %v2064
      %v2113 = vmul.f32 %v2097, %v2065
      %v2114 = vmul.f32 %v2098, %v2066
      %v2115 = vmul.f32 %v2099, %v2067
      %v2116 = vmul.f32 %v2100, %v2068
      %v2117 = vmul.f32 %v2101, %v2069
      %v2118 = vmul.f32 %v2102, %v2070
      %v2119 = vadd.f32 %v2103, 1.4214138
      %v2120 = vadd.f32 %v2104, 1.4214138
      %v2121 = vadd.f32 %v2105, 1.4214138
      %v2122 = vadd.f32 %v2106, 1.4214138
      %v2123 = vadd.f32 %v2107, 1.4214138
      %v2124 = vadd.f32 %v2108, 1.4214138
      %v2125 = vadd.f32 %v2109, 1.4214138
      %v2126 = vadd.f32 %v2110, 1.4214138
      %v2127 = vadd.f32 %v2111, 1.4214138
      %v2128 = vadd.f32 %v2112, 1.4214138
      %v2129 = vadd.f32 %v2113, 1.4214138
      %v2130 = vadd.f32 %v2114, 1.4214138
      %v2131 = vadd.f32 %v2115, 1.4214138
      %v2132 = vadd.f32 %v2116, 1.4214138
      %v2133 = vadd.f32 %v2117, 1.4214138
      %v2134 = vadd.f32 %v2118, 1.4214138
      %v2135 = vmul.f32 %v2119, %v2055
      %v2136 = vmul.f32 %v2120, %v2056
      %v2137 = vmul.f32 %v2121, %v2057
      %v2138 = vmul.f32 %v2122, %v2058
      %v2139 = vmul.f32 %v2123, %v2059
      %v2140 = vmul.f32 %v2124, %v2060
      %v2141 = vmul.f32 %v2125, %v2061
      %v2142 = vmul.f32 %v2126, %v2062
      %v2143 = vmul.f32 %v2127, %v2063
      %v2144 = vmul.f32 %v2128, %v2064
      %v2145 = vmul.f32 %v2129, %v2065
      %v2146 = vmul.f32 %v2130, %v2066
      %v2147 = vmul.f32 %v2131, %v2067
      %v2148 = vmul.f32 %v2132, %v2068
      %v2149 = vmul.f32 %v2133, %v2069
      %v2150 = vmul.f32 %v2134, %v2070
      %v2151 = vadd.f32 %v2135, -0.28449672
      %v2152 = vadd.f32 %v2136, -0.28449672
      %v2153 = vadd.f32 %v2137, -0.28449672
      %v2154 = vadd.f32 %v2138, -0.28449672
      %v2155 = vadd.f32 %v2139, -0.28449672
      %v2156 = vadd.f32 %v2140, -0.28449672
      %v2157 = vadd.f32 %v2141, -0.28449672
      %v2158 = vadd.f32 %v2142, -0.28449672
      %v2159 = vadd.f32 %v2143, -0.28449672
      %v2160 = vadd.f32 %v2144, -0.28449672
      %v2161 = vadd.f32 %v2145, -0.28449672
      %v2162 = vadd.f32 %v2146, -0.28449672
      %v2163 = vadd.f32 %v2147, -0.28449672
      %v2164 = vadd.f32 %v2148, -0.28449672
      %v2165 = vadd.f32 %v2149, -0.28449672
      %v2166 = vadd.f32 %v2150, -0.28449672
      %v2167 = vmul.f32 %v2151, %v2055
      %v2168 = vmul.f32 %v2152, %v2056
      %v2169 = vmul.f32 %v2153, %v2057
      %v2170 = vmul.f32 %v2154, %v2058
      %v2171 = vmul.f32 %v2155, %v2059
      %v2172 = vmul.f32 %v2156, %v2060
      %v2173 = vmul.f32 %v2157, %v2061
      %v2174 = vmul.f32 %v2158, %v2062
      %v2175 = vmul.f32 %v2159, %v2063
      %v2176 = vmul.f32 %v2160, %v2064
      %v2177 = vmul.f32 %v2161, %v2065
      %v2178 = vmul.f32 %v2162, %v2066
      %v2179 = vmul.f32 %v2163, %v2067
      %v2180 = vmul.f32 %v2164, %v2068
      %v2181 = vmul.f32 %v2165, %v2069
      %v2182 = vmul.f32 %v2166, %v2070
      %v2183 = vadd.f32 %v2167, 0.2548296
      %v2184 = vadd.f32 %v2168, 0.2548296
      %v2185 = vadd.f32 %v2169, 0.2548296
      %v2186 = vadd.f32 %v2170, 0.2548296
      %v2187 = vadd.f32 %v2171, 0.2548296
      %v2188 = vadd.f32 %v2172, 0.2548296
      %v2189 = vadd.f32 %v2173, 0.2548296
      %v2190 = vadd.f32 %v2174, 0.2548296
      %v2191 = vadd.f32 %v2175, 0.2548296
      %v2192 = vadd.f32 %v2176, 0.2548296
      %v2193 = vadd.f32 %v2177, 0.2548296
      %v2194 = vadd.f32 %v2178, 0.2548296
      %v2195 = vadd.f32 %v2179, 0.2548296
      %v2196 = vadd.f32 %v2180, 0.2548296
      %v2197 = vadd.f32 %v2181, 0.2548296
      %v2198 = vadd.f32 %v2182, 0.2548296
      %v2199 = vmul.f32 %v2183, %v2055
      %v2200 = vmul.f32 %v2184, %v2056
      %v2201 = vmul.f32 %v2185, %v2057
      %v2202 = vmul.f32 %v2186, %v2058
      %v2203 = vmul.f32 %v2187, %v2059
      %v2204 = vmul.f32 %v2188, %v2060
      %v2205 = vmul.f32 %v2189, %v2061
      %v2206 = vmul.f32 %v2190, %v2062
      %v2207 = vmul.f32 %v2191, %v2063
      %v2208 = vmul.f32 %v2192, %v2064
      %v2209 = vmul.f32 %v2193, %v2065
      %v2210 = vmul.f32 %v2194, %v2066
      %v2211 = vmul.f32 %v2195, %v2067
      %v2212 = vmul.f32 %v2196, %v2068
      %v2213 = vmul.f32 %v2197, %v2069
      %v2214 = vmul.f32 %v2198, %v2070
      %v2215 = vsub.f32 0.0, %v2007
      %v2216 = vsub.f32 0.0, %v2008
      %v2217 = vsub.f32 0.0, %v2009
      %v2218 = vsub.f32 0.0, %v2010
      %v2219 = vsub.f32 0.0, %v2011
      %v2220 = vsub.f32 0.0, %v2012
      %v2221 = vsub.f32 0.0, %v2013
      %v2222 = vsub.f32 0.0, %v2014
      %v2223 = vsub.f32 0.0, %v2015
      %v2224 = vsub.f32 0.0, %v2016
      %v2225 = vsub.f32 0.0, %v2017
      %v2226 = vsub.f32 0.0, %v2018
      %v2227 = vsub.f32 0.0, %v2019
      %v2228 = vsub.f32 0.0, %v2020
      %v2229 = vsub.f32 0.0, %v2021
      %v2230 = vsub.f32 0.0, %v2022
      %v2231 = vmul.f32 %v2215, %v2007
      %v2232 = vmul.f32 %v2216, %v2008
      %v2233 = vmul.f32 %v2217, %v2009
      %v2234 = vmul.f32 %v2218, %v2010
      %v2235 = vmul.f32 %v2219, %v2011
      %v2236 = vmul.f32 %v2220, %v2012
      %v2237 = vmul.f32 %v2221, %v2013
      %v2238 = vmul.f32 %v2222, %v2014
      %v2239 = vmul.f32 %v2223, %v2015
      %v2240 = vmul.f32 %v2224, %v2016
      %v2241 = vmul.f32 %v2225, %v2017
      %v2242 = vmul.f32 %v2226, %v2018
      %v2243 = vmul.f32 %v2227, %v2019
      %v2244 = vmul.f32 %v2228, %v2020
      %v2245 = vmul.f32 %v2229, %v2021
      %v2246 = vmul.f32 %v2230, %v2022
      %v2247 = vmul.f32 %v2231, 1.442695
      %v2248 = vpow.pop %v2247
      %v2249 = vmul.f32 %v2232, 1.442695
      %v2250 = vpow.pop %v2249
      %v2251 = vmul.f32 %v2233, 1.442695
      %v2252 = vpow.pop %v2251
      %v2253 = vmul.f32 %v2234, 1.442695
      %v2254 = vpow.pop %v2253
      %v2255 = vmul.f32 %v2235, 1.442695
      %v2256 = vpow.pop %v2255
      %v2257 = vmul.f32 %v2236, 1.442695
      %v2258 = vpow.pop %v2257
      %v2259 = vmul.f32 %v2237, 1.442695
      %v2260 = vpow.pop %v2259
      %v2261 = vmul.f32 %v2238, 1.442695
      %v2262 = vpow.pop %v2261
      %v2263 = vmul.f32 %v2239, 1.442695
      %v2264 = vpow.pop %v2263
      %v2265 = vmul.f32 %v2240, 1.442695
      %v2266 = vpow.pop %v2265
      %v2267 = vmul.f32 %v2241, 1.442695
      %v2268 = vpow.pop %v2267
      %v2269 = vmul.f32 %v2242, 1.442695
      %v2270 = vpow.pop %v2269
      %v2271 = vmul.f32 %v2243, 1.442695
      %v2272 = vpow.pop %v2271
      %v2273 = vmul.f32 %v2244, 1.442695
      %v2274 = vpow.pop %v2273
      %v2275 = vmul.f32 %v2245, 1.442695
      %v2276 = vpow.pop %v2275
      %v2277 = vmul.f32 %v2246, 1.442695
      %v2278 = vpow.pop %v2277
      %v2279 = vmul.f32 %v2199, %v2248
      %v2280 = vmul.f32 %v2200, %v2250
      %v2281 = vmul.f32 %v2201, %v2252
      %v2282 = vmul.f32 %v2202, %v2254
      %v2283 = vmul.f32 %v2203, %v2256
      %v2284 = vmul.f32 %v2204, %v2258
      %v2285 = vmul.f32 %v2205, %v2260
      %v2286 = vmul.f32 %v2206, %v2262
      %v2287 = vmul.f32 %v2207, %v2264
      %v2288 = vmul.f32 %v2208, %v2266
      %v2289 = vmul.f32 %v2209, %v2268
      %v2290 = vmul.f32 %v2210, %v2270
      %v2291 = vmul.f32 %v2211, %v2272
      %v2292 = vmul.f32 %v2212, %v2274
      %v2293 = vmul.f32 %v2213, %v2276
      %v2294 = vmul.f32 %v2214, %v2278
      %v2295 = vsub.f32 1.0, %v2279
      %v2296 = vsub.f32 1.0, %v2280
      %v2297 = vsub.f32 1.0, %v2281
      %v2298 = vsub.f32 1.0, %v2282
      %v2299 = vsub.f32 1.0, %v2283
      %v2300 = vsub.f32 1.0, %v2284
      %v2301 = vsub.f32 1.0, %v2285
      %v2302 = vsub.f32 1.0, %v2286
      %v2303 = vsub.f32 1.0, %v2287
      %v2304 = vsub.f32 1.0, %v2288
      %v2305 = vsub.f32 1.0, %v2289
      %v2306 = vsub.f32 1.0, %v2290
      %v2307 = vsub.f32 1.0, %v2291
      %v2308 = vsub.f32 1.0, %v2292
      %v2309 = vsub.f32 1.0, %v2293
      %v2310 = vsub.f32 1.0, %v2294
      %v2311 = vmul.f32 %v1991, %v2295
      %v2312 = vmul.f32 %v1992, %v2296
      %v2313 = vmul.f32 %v1993, %v2297
      %v2314 = vmul.f32 %v1994, %v2298
      %v2315 = vmul.f32 %v1995, %v2299
      %v2316 = vmul.f32 %v1996, %v2300
      %v2317 = vmul.f32 %v1997, %v2301
      %v2318 = vmul.f32 %v1998, %v2302
      %v2319 = vmul.f32 %v1999, %v2303
      %v2320 = vmul.f32 %v2000, %v2304
      %v2321 = vmul.f32 %v2001, %v2305
      %v2322 = vmul.f32 %v2002, %v2306
      %v2323 = vmul.f32 %v2003, %v2307
      %v2324 = vmul.f32 %v2004, %v2308
      %v2325 = vmul.f32 %v2005, %v2309
      %v2326 = vmul.f32 %v2006, %v2310
      %v2327 = vadd.f32 %v2311, 1.0
      %v2328 = vadd.f32 %v2312, 1.0
      %v2329 = vadd.f32 %v2313, 1.0
      %v2330 = vadd.f32 %v2314, 1.0
      %v2331 = vadd.f32 %v2315, 1.0
      %v2332 = vadd.f32 %v2316, 1.0
      %v2333 = vadd.f32 %v2317, 1.0
      %v2334 = vadd.f32 %v2318, 1.0
      %v2335 = vadd.f32 %v2319, 1.0
      %v2336 = vadd.f32 %v2320, 1.0
      %v2337 = vadd.f32 %v2321, 1.0
      %v2338 = vadd.f32 %v2322, 1.0
      %v2339 = vadd.f32 %v2323, 1.0
      %v2340 = vadd.f32 %v2324, 1.0
      %v2341 = vadd.f32 %v2325, 1.0
      %v2342 = vadd.f32 %v2326, 1.0
      %v2343 = vmul.f32 %v1943, %v2327
      %v2344 = vmul.f32 %v1944, %v2328
      %v2345 = vmul.f32 %v1945, %v2329
      %v2346 = vmul.f32 %v1946, %v2330
      %v2347 = vmul.f32 %v1947, %v2331
      %v2348 = vmul.f32 %v1948, %v2332
      %v2349 = vmul.f32 %v1949, %v2333
      %v2350 = vmul.f32 %v1950, %v2334
      %v2351 = vmul.f32 %v1951, %v2335
      %v2352 = vmul.f32 %v1952, %v2336
      %v2353 = vmul.f32 %v1953, %v2337
      %v2354 = vmul.f32 %v1954, %v2338
      %v2355 = vmul.f32 %v1955, %v2339
      %v2356 = vmul.f32 %v1956, %v2340
      %v2357 = vmul.f32 %v1957, %v2341
      %v2358 = vmul.f32 %v1958, %v2342
      %v2359 = vadd.f32 %v1377, %v2343
      %v2360 = vadd.f32 %v1378, %v2344
      %v2361 = vadd.f32 %v1379, %v2345
      %v2362 = vadd.f32 %v1380, %v2346
      %v2363 = vadd.f32 %v1381, %v2347
      %v2364 = vadd.f32 %v1382, %v2348
      %v2365 = vadd.f32 %v1383, %v2349
      %v2366 = vadd.f32 %v1384, %v2350
      %v2367 = vadd.f32 %v1385, %v2351
      %v2368 = vadd.f32 %v1386, %v2352
      %v2369 = vadd.f32 %v1387, %v2353
      %v2370 = vadd.f32 %v1388, %v2354
      %v2371 = vadd.f32 %v1389, %v2355
      %v2372 = vadd.f32 %v1390, %v2356
      %v2373 = vadd.f32 %v1391, %v2357
      %v2374 = vadd.f32 %v1392, %v2358
      %v2375 = vpack.c.bf16 %v2360, %v2359
      %v2376 = vpack.c.bf16 %v2362, %v2361
      %v2377 = vpack.c.bf16 %v2364, %v2363
      %v2378 = vpack.c.bf16 %v2366, %v2365
      %v2379 = vpack.c.bf16 %v2368, %v2367
      %v2380 = vpack.c.bf16 %v2370, %v2369
      %v2381 = vpack.c.bf16 %v2372, %v2371
      %v2382 = vpack.c.bf16 %v2374, %v2373
      %v2383 = vld [vmem:[%s7] sm:$0xf]
      %v2384 = vld [vmem:[%s7 + $0x4] sm:$0xf]
      %v2385 = vld [vmem:[%s8] sm:$0x1]
      %v2387 = vlaneseq
      %v2388 = vshrl.u32 %v2387, 7
      %v2389 = vsub.s32 0, %v2388
      %v2390 = vrot.slane %v2385, %v2389
      %v2394 = vunpack.c.l.b16 %v2383
      %v2395 = vunpack.c.l.b16 %v2384
      %v2396 = vpack.c.b16 %v2395, %v2394
      %v2399 = vsel %vm1442, %v2375, 0
      %v2402 = vsel %vm1442, %v2376, 0
      %v2405 = vsel %vm1442, %v2377, 0
      %v2408 = vsel %vm1442, %v2378, 0
      %v2411 = vsel %vm1442, %v2379, 0
      %v2414 = vsel %vm1442, %v2380, 0
      %v2417 = vsel %vm1442, %v2381, 0
      %v2420 = vsel %vm1442, %v2382, 0
      %2422 = vmatprep.subr.bf16.mxu0 0
      %2423 = vmatpush1.bf16.msra.mxu0 %v2396
      %2424 = vmatprep.subr.bf16.mxu0 0
      %2425 = vmatpush1.bf16.msra.mxu0 0
      %2426 = vmatprep.subr.bf16.mxu0 0
      %2427 = vmatpush1.bf16.msra.mxu0 0
      %2428 = vmatprep.subr.bf16.mxu0 0
      %2429 = vmatpush1.bf16.msra.mxu0 0
      %2430 = vmatprep.subr.bf16.mxu0 0
      %2431 = vmatpush1.bf16.msra.mxu0 0
      %2432 = vmatprep.subr.bf16.mxu0 0
      %2433 = vmatpush1.bf16.msra.mxu0 0
      %2434 = vmatprep.subr.bf16.mxu0 0
      %2435 = vmatpush1.bf16.msra.mxu0 0
      %2436 = vmatprep.subr.bf16.mxu0 0
      %2437 = vmatpush1.bf16.msra.mxu0 0
      %2438 = vmatprep.subr.bf16.mxu0 0
      %2439 = vmatpush1.bf16.msra.mxu0 0
      %2440 = vmatprep.subr.bf16.mxu0 0
      %2441 = vmatpush1.bf16.msra.mxu0 0
      %2442 = vmatprep.subr.bf16.mxu0 0
      %2443 = vmatpush1.bf16.msra.mxu0 0
      %2444 = vmatprep.subr.bf16.mxu0 0
      %2445 = vmatpush1.bf16.msra.mxu0 0
      %2446 = vmatprep.subr.bf16.mxu0 0
      %2447 = vmatpush1.bf16.msra.mxu0 0
      %2448 = vmatprep.subr.bf16.mxu0 0
      %2449 = vmatpush1.bf16.msra.mxu0 0
      %2450 = vmatprep.subr.bf16.mxu0 0
      %2451 = vmatpush1.bf16.msra.mxu0 0
      %2452 = vmatprep.subr.bf16.mxu0 0
      %2453 = vmatpush1.bf16.msra.mxu0 0
      %2454 = vmatprep.mubr.bf16.mxu0 0
      %2455 = vmatmul.mubr.bf16.gmra.mrb[0].mxu0 %v2399
      %v2456 = vpop.f32.mrb[0].mxu0
      %v2457 = vadd.f32 %v2390, %v2456
      %v2458 = vpop.f32.mrb[0].mxu0
      %v2459 = vpop.f32.mrb[0].mxu0
      %v2460 = vadd.f32 %v2390, %v2459
      %v2461 = vpop.f32.mrb[0].mxu0
      %2462 = vmatprep.mubr.bf16.mxu0 0
      %2463 = vmatmul.mubr.bf16.gmra.mrb[0].mxu0 %v2402
      %v2464 = vpop.f32.mrb[0].mxu0
      %v2465 = vadd.f32 %v2390, %v2464
      %v2466 = vpop.f32.mrb[0].mxu0
      %v2467 = vpop.f32.mrb[0].mxu0
      %v2468 = vadd.f32 %v2390, %v2467
      %v2469 = vpop.f32.mrb[0].mxu0
      %2470 = vmatprep.mubr.bf16.mxu0 0
      %2471 = vmatmul.mubr.bf16.gmra.mrb[0].mxu0 %v2405
      %v2472 = vpop.f32.mrb[0].mxu0
      %v2473 = vadd.f32 %v2390, %v2472
      %v2474 = vpop.f32.mrb[0].mxu0
      %v2475 = vpop.f32.mrb[0].mxu0
      %v2476 = vadd.f32 %v2390, %v2475
      %v2477 = vpop.f32.mrb[0].mxu0
      %2478 = vmatprep.mubr.bf16.mxu0 0
      %2479 = vmatmul.mubr.bf16.gmra.mrb[0].mxu0 %v2408
      %v2480 = vpop.f32.mrb[0].mxu0
      %v2481 = vadd.f32 %v2390, %v2480
      %v2482 = vpop.f32.mrb[0].mxu0
      %v2483 = vpop.f32.mrb[0].mxu0
      %v2484 = vadd.f32 %v2390, %v2483
      %v2485 = vpop.f32.mrb[0].mxu0
      %2486 = vmatprep.mubr.bf16.mxu0 0
      %2487 = vmatmul.mubr.bf16.gmra.mrb[0].mxu0 %v2411
      %v2488 = vpop.f32.mrb[0].mxu0
      %v2489 = vadd.f32 %v2390, %v2488
      %v2490 = vpop.f32.mrb[0].mxu0
      %v2491 = vpop.f32.mrb[0].mxu0
      %v2492 = vadd.f32 %v2390, %v2491
      %v2493 = vpop.f32.mrb[0].mxu0
      %2494 = vmatprep.mubr.bf16.mxu0 0
      %2495 = vmatmul.mubr.bf16.gmra.mrb[0].mxu0 %v2414
      %v2496 = vpop.f32.mrb[0].mxu0
      %v2497 = vadd.f32 %v2390, %v2496
      %v2498 = vpop.f32.mrb[0].mxu0
      %v2499 = vpop.f32.mrb[0].mxu0
      %v2500 = vadd.f32 %v2390, %v2499
      %v2501 = vpop.f32.mrb[0].mxu0
      %2502 = vmatprep.mubr.bf16.mxu0 0
      %2503 = vmatmul.mubr.bf16.gmra.mrb[0].mxu0 %v2417
      %v2504 = vpop.f32.mrb[0].mxu0
      %v2505 = vadd.f32 %v2390, %v2504
      %v2506 = vpop.f32.mrb[0].mxu0
      %v2507 = vpop.f32.mrb[0].mxu0
      %v2508 = vadd.f32 %v2390, %v2507
      %v2509 = vpop.f32.mrb[0].mxu0
      %2510 = vmatprep.mubr.bf16.mxu0 0
      %2511 = vmatmul.mubr.bf16.gmra.mrb[0].mxu0 %v2420
      %v2512 = vpop.f32.mrb[0].mxu0
      %v2513 = vadd.f32 %v2390, %v2512
      %v2514 = vpop.f32.mrb[0].mxu0
      %v2515 = vpop.f32.mrb[0].mxu0
      %v2516 = vadd.f32 %v2390, %v2515
      %v2517 = vpop.f32.mrb[0].mxu0
      %2518 = vdwg.mxu0
      %2519 = vst.msk [vmem:[%s356] sm:$0xff] %vm394, %v2457
      %2520 = vst.msk [vmem:[%s356 + $0x8] sm:$0xff] %vm394, %v2460
      %2521 = vst.msk [vmem:[%s356 + $0x10] sm:$0xff] %vm394, %v2465
      %2522 = vst.msk [vmem:[%s356 + $0x18] sm:$0xff] %vm394, %v2468
      %2523 = vst.msk [vmem:[%s356 + $0x20] sm:$0xff] %vm394, %v2473
      %2524 = vst.msk [vmem:[%s356 + $0x28] sm:$0xff] %vm394, %v2476
      %2525 = vst.msk [vmem:[%s356 + $0x30] sm:$0xff] %vm394, %v2481
      %2526 = vst.msk [vmem:[%s356 + $0x38] sm:$0xff] %vm394, %v2484
      %2527 = vst.msk [vmem:[%s356 + $0x40] sm:$0xff] %vm394, %v2489
      %2528 = vst.msk [vmem:[%s356 + $0x48] sm:$0xff] %vm394, %v2492
      %2529 = vst.msk [vmem:[%s356 + $0x50] sm:$0xff] %vm394, %v2497
      %2530 = vst.msk [vmem:[%s356 + $0x58] sm:$0xff] %vm394, %v2500
      %2531 = vst.msk [vmem:[%s356 + $0x60] sm:$0xff] %vm394, %v2505
      %2532 = vst.msk [vmem:[%s356 + $0x68] sm:$0xff] %vm394, %v2508
      %2533 = vst.msk [vmem:[%s356 + $0x70] sm:$0xff] %vm394, %v2513
      %2534 = vst.msk [vmem:[%s356 + $0x78] sm:$0xff] %vm394, %v2516
      %s2535 = smul.u32 8, %s25
      %p2536 = scmp.lt.s32.totalorder %s24, 1
      %s2537 = scalar_select %p2536, %s24, 1
      %p2538 = scmp.lt.s32.totalorder %s2535, 15
      %s2539 = scalar_select %p2538, %s2535, 15
      %s2540 = smul.addr %s2539, 2
      %s2541 = smul.addr %s2537, 32
      %s2542 = sadd.s32 %s2540, %s2541
      %s2543 = smul.addr %s2542, 8
      %s2544 = scalar_lea.vmem %s9, %s2543
      // Predicated region
      $region57: #{tpu_custom_call.1} parent=55 // pred_check
        %p2545 = pneg %p246
      $region58: #{tpu_custom_call.1} parent=55 // pred_check_branch
        %2547 = sbr.rel (%p2545) target = $region60
      $region59: #{tpu_custom_call.1} parent=55 // pred_region
        %s2548 = smul.u32 8, %s25
      $region60: #{tpu_custom_call.1} parent=55 // pred_fallthru
        _
    $region56: #{tpu_custom_call.1} parent=5 // pred_fallthru
      _
    %p2549 = scmp.le.s32.totalorder 2, %s15
    // Predicated region
    $region61: #{tpu_custom_call.1} parent=5 // pred_check
      %p2550 = pneg %p2549
    $region62: #{tpu_custom_call.1} parent=5 // pred_check_branch
      %2552 = sbr.rel (%p2550) target = $region64
    $region63: #{tpu_custom_call.1} parent=5 // pred_region
      %s2553 = ssub.s32 %s15, 2
      // Predicated region
      $region65: #{tpu_custom_call.1} parent=63 // pred_check
        %p2554 = pneg %p252
      $region66: #{tpu_custom_call.1} parent=63 // pred_check_branch
        %2556 = sbr.rel (%p2554) target = $region68
      $region67: #{tpu_custom_call.1} parent=63 // pred_region
        %s2557 = smul.u32 8, %s27
        %p2558 = scmp.lt.s32.totalorder %s26, 1
        %s2559 = scalar_select %p2558, %s26, 1
        %p2560 = scmp.lt.s32.totalorder %s2557, 15
        %s2561 = scalar_select %p2560, %s2557, 15
        %s2562 = smul.addr %s2561, 2
        %s2563 = smul.addr %s2559, 32
        %s2564 = sadd.s32 %s2562, %s2563
        %s2565 = smul.addr %s2564, 8
        %s2566 = scalar_lea.vmem %s9, %s2565
      $region68: #{tpu_custom_call.1} parent=63 // pred_fallthru
        _
    $region64: #{tpu_custom_call.1} parent=5 // pred_fallthru
      _
  $region6: #{tpu_custom_call.1} parent=0 // loop_footer
    %s19 = sadd.s32 1, %s15
  $region7: #{tpu_custom_call.1} parent=0 // loop_footer_branch
    %14 = sbr.rel target = $region3
  $region8: #{tpu_custom_call.1} parent=0 // loop_exit
    _

</llo_original>
